<compile_context>
chip_gen: v6e
topology: v6e:2x2x1
jax: 0.10.0
libtpu: 0.0.40
codegen_flags: <defaults>
</compile_context>

<pallas_src>
import functools

import jax
import jax.numpy as jnp
import numpy as np
from jax.experimental import pallas as pl
from jax.experimental.pallas import tpu as pltpu

_NEG_SLOPE = 0.2
# Scoped-VMEM cap: below v7x's 64 MiB/TC physical VMEM, above the 32 MiB
# default so larger strips still double-buffer on v5e/v6e.
_VMEM_LIMIT_BYTES = 48 * 1024 * 1024
# Working-set budget used to derive the destination-strip size; conservative
# so the same tile choice fits every generation (incl. v7x's 64 MiB VMEM).
_TILE_BUDGET_BYTES = 24 * 1024 * 1024


def _pick_tile(n, max_tile=512):
    """Row-tile size: full extent if small, else a multiple of 8 <= max_tile."""
    if n <= max_tile:
        return n                      # full dim is always a legal block extent
    t = min(max_tile, n)
    return max(8, t - t % 8)


def _dst_tile(n_dst, n_src, budget_bytes=_TILE_BUDGET_BYTES):
    # ~20 live bytes per (dst_row, src) element across the masked-softmax strip
    # (double-buffered bf16 adjacency strip + a few f32 (tile_d, n_src) temps).
    cap = max(8, budget_bytes // (20 * max(n_src, 1)))
    return _pick_tile(n_dst, max_tile=min(512, cap))


# --------------------------- stage 1: projection ----------------------------
def gat_project_kernel(feat_ref, w_ref, al_ref, ar_ref, z_ref, el_ref, er_ref,
                       *, apply_elu):
    x = feat_ref[...].astype(jnp.float32)
    if apply_elu:
        # Fused F.elu (alpha=1).  exp(x)-1 (rather than expm1) sticks to ops
        # with guaranteed Mosaic lowering; the numeric delta is far below the
        # test tolerance.
        x = jnp.where(x > 0, x, jnp.exp(x) - 1.0)

    # fc: bf16 operands on the MXU, f32 accumulation.
    z = jnp.dot(x.astype(jnp.bfloat16), w_ref[...],
                preferred_element_type=jnp.float32)            # (tile_n, H*F)

    # Per-head attention logits via block-diagonal matmuls (MXU) instead of
    # per-head lane slices + cross-lane reductions.
    el_ref[...] = jnp.dot(z, al_ref[...], preferred_element_type=jnp.float32)
    er_ref[...] = jnp.dot(z, ar_ref[...], preferred_element_type=jnp.float32)
    z_ref[...] = z.astype(z_ref.dtype)


# ----------------- stage 2: edge softmax + aggregation ----------------------
def gat_attn_kernel(adj_ref, z_ref, elt_ref, er_ref, b_ref, out_ref,
                    *, num_heads, out_feats, neg_slope):
    mask = adj_ref[...] > 0                    # (tile_d, N) — computed once
    zb = z_ref[...]                            # (N, H*F) bf16 source features
    elt = elt_ref[...]                         # (H, N) f32 source logits
    er = er_ref[...]                           # (tile_d, H) f32 dest logits

    head_outs = []
    for h in range(num_heads):
        lo = h * out_feats
        # e[d, s] = leaky_relu(el[s] + er[d]) on edges s -> d, else -inf.
        e = er[:, h:h + 1] + elt[h:h + 1, :]                    # (tile_d, N)
        e = jnp.where(e > 0, e, neg_slope * e)
        e = jnp.where(mask, e, jnp.float32(-1e30))

        # Edge softmax over incoming edges (source axis = lanes).
        m = jnp.max(e, axis=-1, keepdims=True)
        p = jnp.where(mask, jnp.exp(e - m), 0.0)
        s = jnp.sum(p, axis=-1, keepdims=True)
        inv = pl.reciprocal(jnp.maximum(s, 1e-9), approx=True)  # EUP, no VPU div
        alpha = (p * inv).astype(jnp.bfloat16)

        # Aggregation: (tile_d, N) @ (N, F_out) on the MXU, bf16 in / f32 acc.
        head_outs.append(jnp.dot(alpha, zb[:, lo:lo + out_feats],
                                 preferred_element_type=jnp.float32))

    # One lane-dense full-width store per destination tile (+ bias, one cast).
    out = jnp.concatenate(head_outs, axis=-1) + b_ref[...]
    out_ref[...] = out.astype(out_ref.dtype)


# ------------------------------ layer wrapper --------------------------------
def gat_layer(adj_t, feat, w, al, ar, b, *, apply_elu=False,
              out_dtype=jnp.float32, tile_d=None, tile_n=None):
    n, in_feats = feat.shape
    num_heads, out_feats = al.shape
    hf = num_heads * out_feats

    # Block-diagonal logit matrices: (z @ AL)[:, h] == sum_f z[:, h*F+f]*al[h,f]
    eye = jnp.eye(num_heads, dtype=jnp.float32)
    al_bd = (al[:, :, None] * eye[:, None, :]).reshape(hf, num_heads)
    ar_bd = (ar[:, :, None] * eye[:, None, :]).reshape(hf, num_heads)
    b_flat = b.reshape(1, hf).astype(jnp.float32)

    tn = tile_n if tile_n is not None else _pick_tile(n)
    td = tile_d if tile_d is not None else _dst_tile(n, n)

    cparams = pltpu.CompilerParams(dimension_semantics=("parallel",),
                                   vmem_limit_bytes=_VMEM_LIMIT_BYTES)

    # ---- stage 1: projection + attention logits (tiled over node rows) -----
    z, el, er = pl.pallas_call(
        functools.partial(gat_project_kernel, apply_elu=apply_elu),
        grid=(pl.cdiv(n, tn),),
        in_specs=[
            pl.BlockSpec((tn, in_feats), lambda i: (i, 0)),     # feat tile
            pl.BlockSpec((in_feats, hf), lambda i: (0, 0)),     # W (bf16, full)
            pl.BlockSpec((hf, num_heads), lambda i: (0, 0)),    # AL block-diag
            pl.BlockSpec((hf, num_heads), lambda i: (0, 0)),    # AR block-diag
        ],
        out_specs=[
            pl.BlockSpec((tn, hf), lambda i: (i, 0)),
            pl.BlockSpec((tn, num_heads), lambda i: (i, 0)),
            pl.BlockSpec((tn, num_heads), lambda i: (i, 0)),
        ],
        out_shape=(
            jax.ShapeDtypeStruct((n, hf), jnp.bfloat16),        # z (bf16)
            jax.ShapeDtypeStruct((n, num_heads), jnp.float32),  # el (per source)
            jax.ShapeDtypeStruct((n, num_heads), jnp.float32),  # er (per dest)
        ),
        compiler_params=cparams,
    )(feat, w.astype(jnp.bfloat16), al_bd, ar_bd)

    # Source logits laid out (H, N): sources on lanes, so stage 2 broadcasts a
    # sublane row per head instead of doing per-head transposes in the hot loop.
    elt = el.T

    # ---- stage 2: edge softmax + aggregation (tiled over destination rows) --
    out = pl.pallas_call(
        functools.partial(gat_attn_kernel, num_heads=num_heads,
                          out_feats=out_feats, neg_slope=_NEG_SLOPE),
        grid=(pl.cdiv(n, td),),
        in_specs=[
            pl.BlockSpec((td, n), lambda d: (d, 0)),            # adj strip (bf16)
            pl.BlockSpec((n, hf), lambda d: (0, 0)),            # z, resident
            pl.BlockSpec((num_heads, n), lambda d: (0, 0)),     # elT, resident
            pl.BlockSpec((td, num_heads), lambda d: (d, 0)),    # er strip
            pl.BlockSpec((1, hf), lambda d: (0, 0)),            # bias
        ],
        out_specs=pl.BlockSpec((td, hf), lambda d: (d, 0)),
        out_shape=jax.ShapeDtypeStruct((n, hf), out_dtype),
        compiler_params=cparams,
    )(adj_t, z, elt, er, b_flat)
    return out


def gatnet_forward(params, adj, feat, *, tile_d=None, tile_n=None):
    """adj[src, dst] = 1 iff edge src -> dst; feat is (N, in_feats)."""
    # Adjacency as a bf16 0/1 mask in (dst, src) layout; built once and read by
    # both layers (it is the dominant HBM stream, so keep it narrow).
    adj_t = (adj.T > 0).astype(jnp.bfloat16)

    # layer1: output flattened over heads, kept in bf16 (only feeds bf16 MXU).
    x = gat_layer(adj_t, feat, params["w1"], params["al1"], params["ar1"],
                  params["b1"], apply_elu=False, out_dtype=jnp.bfloat16,
                  tile_d=tile_d, tile_n=tile_n)
    # F.elu fused into layer2's projection kernel; layer2 has a single head so
    # the final mean over the head dimension (size 1) is the identity.
    x = gat_layer(adj_t, x, params["w2"], params["al2"], params["ar2"],
                  params["b2"], apply_elu=True, out_dtype=jnp.float32,
                  tile_d=tile_d, tile_n=tile_n)
    return x  # (N, out_feats)


# ---------------- pure-JAX reference (for correctness check) ----------------
def gat_layer_ref(adj, feat, w, al, ar, b):
    n = feat.shape[0]
    num_heads, out_feats = al.shape
    z = (feat @ w).reshape(n, num_heads, out_feats)
    el = jnp.sum(z * al[None], axis=-1)          # (N, H)
    er = jnp.sum(z * ar[None], axis=-1)          # (N, H)
    e = el[:, None, :] + er[None, :, :]          # (src, dst, H)
    e = jnp.where(e > 0, e, 0.2 * e)
    mask = (adj > 0)[:, :, None]
    e = jnp.where(mask, e, -jnp.inf)
    alpha = jax.nn.softmax(e, axis=0)
    alpha = jnp.where(mask, alpha, 0.0)
    out = jnp.einsum("sdh,shf->dhf", alpha, z) + b.reshape(1, num_heads, out_feats)
    return out


def gatnet_ref(params, adj, feat):
    x = gat_layer_ref(adj, feat, params["w1"], params["al1"], params["ar1"], params["b1"])
    x = x.reshape(x.shape[0], -1)
    x = jax.nn.elu(x)
    x = gat_layer_ref(adj, x, params["w2"], params["al2"], params["ar2"], params["b2"])
    return jnp.mean(x, axis=1)


# ---------------- deterministic parameter init ----------------
def init_params(key, in_feats, hidden_feats, out_feats, num_heads):
    ks = jax.random.split(key, 8)

    def glorot(k, shape):
        s = jnp.sqrt(6.0 / (shape[0] + shape[1]))
        return jax.random.uniform(k, shape, jnp.float32, -s, s)

    return {
        # layer1: GATConv(in_feats, hidden_feats, num_heads)
        "w1": glorot(ks[0], (in_feats, hidden_feats * num_heads)),
        "al1": 0.2 * jax.random.normal(ks[1], (num_heads, hidden_feats), jnp.float32),
        "ar1": 0.2 * jax.random.normal(ks[2], (num_heads, hidden_feats), jnp.float32),
        "b1": 0.1 * jax.random.normal(ks[3], (num_heads, hidden_feats), jnp.float32),
        # layer2: GATConv(hidden_feats * num_heads, out_feats, num_heads=1)
        "w2": glorot(ks[4], (hidden_feats * num_heads, out_feats)),
        "al2": 0.2 * jax.random.normal(ks[5], (1, out_feats), jnp.float32),
        "ar2": 0.2 * jax.random.normal(ks[6], (1, out_feats), jnp.float32),
        "b2": 0.1 * jax.random.normal(ks[7], (1, out_feats), jnp.float32),
    }


if __name__ == "__main__":
    N, in_feats, hidden_feats, out_feats, num_heads = 32, 16, 8, 4, 2

    key = jax.random.PRNGKey(0)
    k_adj, k_feat, k_param = jax.random.split(key, 3)

    # Dense synthetic graph; self-loops guarantee no zero in-degree node.
    adj = (jax.random.uniform(k_adj, (N, N)) < 0.25).astype(jnp.float32)
    adj = jnp.maximum(adj, jnp.eye(N, dtype=jnp.float32))   # adj[src, dst]
    feat = jax.random.normal(k_feat, (N, in_feats), jnp.float32)

    params = init_params(k_param, in_feats, hidden_feats, out_feats, num_heads)

    # Explicit small tiles so the destination/node grids take multiple steps
    # (exercises the pipelined, megacore-parallel path even at toy size).
    fwd = jax.jit(functools.partial(gatnet_forward, tile_d=16, tile_n=16))

    out = jax.block_until_ready(fwd(params, adj, feat))
    ref = jax.block_until_ready(gatnet_ref(params, adj, feat))

    assert out.shape == (N, out_feats), out.shape
    # bf16 MXU operands + approx reciprocal -> slightly looser tolerance.
    np.testing.assert_allclose(np.asarray(out), np.asarray(ref), rtol=3e-2, atol=3e-2)
    print("KERNEL_OK")
</pallas_src>

<mosaic_0001>
module attributes {stable_mosaic.version = 11 : i64} {
  func.func @gat_project_kernel(%arg0: i32, %arg1: memref<16x16xf32, #tpu.memory_space<vmem>>, %arg2: memref<16x16xbf16, #tpu.memory_space<vmem>>, %arg3: memref<16x2xf32, #tpu.memory_space<vmem>>, %arg4: memref<16x2xf32, #tpu.memory_space<vmem>>, %arg5: memref<16x16xbf16, #tpu.memory_space<vmem>>, %arg6: memref<16x2xf32, #tpu.memory_space<vmem>>, %arg7: memref<16x2xf32, #tpu.memory_space<vmem>>) attributes {dimension_semantics = [#tpu.dimension_semantics<parallel>], iteration_bounds = array<i64: 2>, scalar_prefetch = 0 : i64, scratch_operands = 0 : i64, tpu.core_type = #tpu.core_type<tc>, window_params = [{transform_indices = @transform_0, window_bounds = array<i64: 16, 16>}, {pipeline_mode = #tpu.pipeline_mode<synchronous>, transform_indices = @transform_1, window_bounds = array<i64: 16, 16>}, {pipeline_mode = #tpu.pipeline_mode<synchronous>, transform_indices = @transform_2, window_bounds = array<i64: 16, 2>}, {pipeline_mode = #tpu.pipeline_mode<synchronous>, transform_indices = @transform_3, window_bounds = array<i64: 16, 2>}, {transform_indices = @transform_4, window_bounds = array<i64: 16, 16>}, {transform_indices = @transform_5, window_bounds = array<i64: 16, 2>}, {transform_indices = @transform_6, window_bounds = array<i64: 16, 2>}]} {
    %c0 = arith.constant 0 : index
    %c0_0 = arith.constant 0 : index
    %0 = vector.load %arg1[%c0, %c0_0] : memref<16x16xf32, #tpu.memory_space<vmem>>, vector<16x16xf32>
    %1 = arith.truncf %0 : vector<16x16xf32> to vector<16x16xbf16>
    %c0_1 = arith.constant 0 : index
    %c0_2 = arith.constant 0 : index
    %2 = vector.load %arg2[%c0_1, %c0_2] : memref<16x16xbf16, #tpu.memory_space<vmem>>, vector<16x16xbf16>
    %cst = arith.constant dense<0.000000e+00> : vector<16x16xf32>
    %3 = tpu.matmul %1, %2, %cst {dimension_numbers = #tpu.dot_dimension_numbers<[1], [0], [0], [1], [0, 0, 1, 1], [], []>} : vector<16x16xbf16>, vector<16x16xbf16>, vector<16x16xf32> -> vector<16x16xf32>
    %c0_3 = arith.constant 0 : index
    %c0_4 = arith.constant 0 : index
    %4 = vector.load %arg3[%c0_3, %c0_4] : memref<16x2xf32, #tpu.memory_space<vmem>>, vector<16x2xf32>
    %cst_5 = arith.constant dense<0.000000e+00> : vector<16x2xf32>
    %5 = tpu.matmul %3, %4, %cst_5 {dimension_numbers = #tpu.dot_dimension_numbers<[1], [0], [0], [1], [0, 0, 1, 1], [], []>} : vector<16x16xf32>, vector<16x2xf32>, vector<16x2xf32> -> vector<16x2xf32>
    %c0_6 = arith.constant 0 : index
    %c0_7 = arith.constant 0 : index
    %6 = vector.load %arg6[%c0_6, %c0_7] : memref<16x2xf32, #tpu.memory_space<vmem>>, vector<16x2xf32>
    tpu.vector_store %arg6[%c0_6, %c0_7], %5 {strides = array<i32>} : memref<16x2xf32, #tpu.memory_space<vmem>>, vector<16x2xf32>,
    %c0_8 = arith.constant 0 : index
    %c0_9 = arith.constant 0 : index
    %7 = vector.load %arg4[%c0_8, %c0_9] : memref<16x2xf32, #tpu.memory_space<vmem>>, vector<16x2xf32>
    %cst_10 = arith.constant dense<0.000000e+00> : vector<16x2xf32>
    %8 = tpu.matmul %3, %7, %cst_10 {dimension_numbers = #tpu.dot_dimension_numbers<[1], [0], [0], [1], [0, 0, 1, 1], [], []>} : vector<16x16xf32>, vector<16x2xf32>, vector<16x2xf32> -> vector<16x2xf32>
    %c0_11 = arith.constant 0 : index
    %c0_12 = arith.constant 0 : index
    %9 = vector.load %arg7[%c0_11, %c0_12] : memref<16x2xf32, #tpu.memory_space<vmem>>, vector<16x2xf32>
    tpu.vector_store %arg7[%c0_11, %c0_12], %8 {strides = array<i32>} : memref<16x2xf32, #tpu.memory_space<vmem>>, vector<16x2xf32>,
    %10 = arith.truncf %3 : vector<16x16xf32> to vector<16x16xbf16>
    %c0_13 = arith.constant 0 : index
    %c0_14 = arith.constant 0 : index
    %11 = vector.load %arg5[%c0_13, %c0_14] : memref<16x16xbf16, #tpu.memory_space<vmem>>, vector<16x16xbf16>
    tpu.vector_store %arg5[%c0_13, %c0_14], %10 {strides = array<i32>} : memref<16x16xbf16, #tpu.memory_space<vmem>>, vector<16x16xbf16>,
    return
  }
  func.func @transform_0(%arg0: i32) -> (i32, i32) {
    %c0_i32 = arith.constant 0 : i32
    %c0_i32_0 = arith.constant 0 : i32
    return %arg0, %c0_i32 : i32, i32
  }
  func.func @transform_1(%arg0: i32) -> (i32, i32) {
    %c0_i32 = arith.constant 0 : i32
    %c0_i32_0 = arith.constant 0 : i32
    %c0_i32_1 = arith.constant 0 : i32
    return %c0_i32, %c0_i32_0 : i32, i32
  }
  func.func @transform_2(%arg0: i32) -> (i32, i32) {
    %c0_i32 = arith.constant 0 : i32
    %c0_i32_0 = arith.constant 0 : i32
    %c0_i32_1 = arith.constant 0 : i32
    return %c0_i32, %c0_i32_0 : i32, i32
  }
  func.func @transform_3(%arg0: i32) -> (i32, i32) {
    %c0_i32 = arith.constant 0 : i32
    %c0_i32_0 = arith.constant 0 : i32
    %c0_i32_1 = arith.constant 0 : i32
    return %c0_i32, %c0_i32_0 : i32, i32
  }
  func.func @transform_4(%arg0: i32) -> (i32, i32) {
    %c0_i32 = arith.constant 0 : i32
    %c0_i32_0 = arith.constant 0 : i32
    return %arg0, %c0_i32 : i32, i32
  }
  func.func @transform_5(%arg0: i32) -> (i32, i32) {
    %c0_i32 = arith.constant 0 : i32
    %c0_i32_0 = arith.constant 0 : i32
    return %arg0, %c0_i32 : i32, i32
  }
  func.func @transform_6(%arg0: i32) -> (i32, i32) {
    %c0_i32 = arith.constant 0 : i32
    %c0_i32_0 = arith.constant 0 : i32
    return %arg0, %c0_i32 : i32, i32
  }
}

module attributes {stable_mosaic.version = 11 : i64} {
  func.func @gat_project_kernel(%arg0: i32, %arg1: memref<16x16xbf16, #tpu.memory_space<vmem>>, %arg2: memref<16x4xbf16, #tpu.memory_space<vmem>>, %arg3: memref<4x1xf32, #tpu.memory_space<vmem>>, %arg4: memref<4x1xf32, #tpu.memory_space<vmem>>, %arg5: memref<16x4xbf16, #tpu.memory_space<vmem>>, %arg6: memref<16x1xf32, #tpu.memory_space<vmem>>, %arg7: memref<16x1xf32, #tpu.memory_space<vmem>>) attributes {dimension_semantics = [#tpu.dimension_semantics<parallel>], iteration_bounds = array<i64: 2>, scalar_prefetch = 0 : i64, scratch_operands = 0 : i64, tpu.core_type = #tpu.core_type<tc>, window_params = [{transform_indices = @transform_0, window_bounds = array<i64: 16, 16>}, {pipeline_mode = #tpu.pipeline_mode<synchronous>, transform_indices = @transform_1, window_bounds = array<i64: 16, 4>}, {pipeline_mode = #tpu.pipeline_mode<synchronous>, transform_indices = @transform_2, window_bounds = array<i64: 4, 1>}, {pipeline_mode = #tpu.pipeline_mode<synchronous>, transform_indices = @transform_3, window_bounds = array<i64: 4, 1>}, {transform_indices = @transform_4, window_bounds = array<i64: 16, 4>}, {transform_indices = @transform_5, window_bounds = array<i64: 16, 1>}, {transform_indices = @transform_6, window_bounds = array<i64: 16, 1>}]} {
    %c0 = arith.constant 0 : index
    %c0_0 = arith.constant 0 : index
    %0 = vector.load %arg1[%c0, %c0_0] : memref<16x16xbf16, #tpu.memory_space<vmem>>, vector<16x16xbf16>
    %1 = arith.extf %0 : vector<16x16xbf16> to vector<16x16xf32>
    %cst = arith.constant 0.000000e+00 : f32
    %2 = vector.broadcast %cst : f32 to vector<16x16xf32>
    %3 = arith.cmpf ogt, %1, %2 : vector<16x16xf32>
    %4 = math.exp %1 : vector<16x16xf32>
    %cst_1 = arith.constant 1.000000e+00 : f32
    %5 = vector.broadcast %cst_1 : f32 to vector<16x16xf32>
    %6 = arith.subf %4, %5 : vector<16x16xf32>
    %7 = arith.select %3, %1, %6 : vector<16x16xi1>, vector<16x16xf32>
    %8 = arith.truncf %7 : vector<16x16xf32> to vector<16x16xbf16>
    %c0_2 = arith.constant 0 : index
    %c0_3 = arith.constant 0 : index
    %9 = vector.load %arg2[%c0_2, %c0_3] : memref<16x4xbf16, #tpu.memory_space<vmem>>, vector<16x4xbf16>
    %cst_4 = arith.constant dense<0.000000e+00> : vector<16x4xf32>
    %10 = tpu.matmul %8, %9, %cst_4 {dimension_numbers = #tpu.dot_dimension_numbers<[1], [0], [0], [1], [0, 0, 1, 1], [], []>} : vector<16x16xbf16>, vector<16x4xbf16>, vector<16x4xf32> -> vector<16x4xf32>
    %c0_5 = arith.constant 0 : index
    %c0_6 = arith.constant 0 : index
    %11 = vector.load %arg3[%c0_5, %c0_6] : memref<4x1xf32, #tpu.memory_space<vmem>>, vector<4x1xf32>
    %cst_7 = arith.constant dense<0.000000e+00> : vector<16x1xf32>
    %12 = tpu.matmul %10, %11, %cst_7 {dimension_numbers = #tpu.dot_dimension_numbers<[1], [0], [0], [1], [0, 0, 1, 1], [], []>} : vector<16x4xf32>, vector<4x1xf32>, vector<16x1xf32> -> vector<16x1xf32>
    %c0_8 = arith.constant 0 : index
    %c0_9 = arith.constant 0 : index
    %13 = vector.load %arg6[%c0_8, %c0_9] : memref<16x1xf32, #tpu.memory_space<vmem>>, vector<16x1xf32>
    tpu.vector_store %arg6[%c0_8, %c0_9], %12 {strides = array<i32>} : memref<16x1xf32, #tpu.memory_space<vmem>>, vector<16x1xf32>,
    %c0_10 = arith.constant 0 : index
    %c0_11 = arith.constant 0 : index
    %14 = vector.load %arg4[%c0_10, %c0_11] : memref<4x1xf32, #tpu.memory_space<vmem>>, vector<4x1xf32>
    %cst_12 = arith.constant dense<0.000000e+00> : vector<16x1xf32>
    %15 = tpu.matmul %10, %14, %cst_12 {dimension_numbers = #tpu.dot_dimension_numbers<[1], [0], [0], [1], [0, 0, 1, 1], [], []>} : vector<16x4xf32>, vector<4x1xf32>, vector<16x1xf32> -> vector<16x1xf32>
    %c0_13 = arith.constant 0 : index
    %c0_14 = arith.constant 0 : index
    %16 = vector.load %arg7[%c0_13, %c0_14] : memref<16x1xf32, #tpu.memory_space<vmem>>, vector<16x1xf32>
    tpu.vector_store %arg7[%c0_13, %c0_14], %15 {strides = array<i32>} : memref<16x1xf32, #tpu.memory_space<vmem>>, vector<16x1xf32>,
    %17 = arith.truncf %10 : vector<16x4xf32> to vector<16x4xbf16>
    %c0_15 = arith.constant 0 : index
    %c0_16 = arith.constant 0 : index
    %18 = vector.load %arg5[%c0_15, %c0_16] : memref<16x4xbf16, #tpu.memory_space<vmem>>, vector<16x4xbf16>
    tpu.vector_store %arg5[%c0_15, %c0_16], %17 {strides = array<i32>} : memref<16x4xbf16, #tpu.memory_space<vmem>>, vector<16x4xbf16>,
    return
  }
  func.func @transform_0(%arg0: i32) -> (i32, i32) {
    %c0_i32 = arith.constant 0 : i32
    %c0_i32_0 = arith.constant 0 : i32
    return %arg0, %c0_i32 : i32, i32
  }
  func.func @transform_1(%arg0: i32) -> (i32, i32) {
    %c0_i32 = arith.constant 0 : i32
    %c0_i32_0 = arith.constant 0 : i32
    %c0_i32_1 = arith.constant 0 : i32
    return %c0_i32, %c0_i32_0 : i32, i32
  }
  func.func @transform_2(%arg0: i32) -> (i32, i32) {
    %c0_i32 = arith.constant 0 : i32
    %c0_i32_0 = arith.constant 0 : i32
    %c0_i32_1 = arith.constant 0 : i32
    return %c0_i32, %c0_i32_0 : i32, i32
  }
  func.func @transform_3(%arg0: i32) -> (i32, i32) {
    %c0_i32 = arith.constant 0 : i32
    %c0_i32_0 = arith.constant 0 : i32
    %c0_i32_1 = arith.constant 0 : i32
    return %c0_i32, %c0_i32_0 : i32, i32
  }
  func.func @transform_4(%arg0: i32) -> (i32, i32) {
    %c0_i32 = arith.constant 0 : i32
    %c0_i32_0 = arith.constant 0 : i32
    return %arg0, %c0_i32 : i32, i32
  }
  func.func @transform_5(%arg0: i32) -> (i32, i32) {
    %c0_i32 = arith.constant 0 : i32
    %c0_i32_0 = arith.constant 0 : i32
    return %arg0, %c0_i32 : i32, i32
  }
  func.func @transform_6(%arg0: i32) -> (i32, i32) {
    %c0_i32 = arith.constant 0 : i32
    %c0_i32_0 = arith.constant 0 : i32
    return %arg0, %c0_i32 : i32, i32
  }
}

module attributes {stable_mosaic.version = 11 : i64} {
  func.func @gat_attn_kernel(%arg0: i32, %arg1: memref<16x32xbf16, #tpu.memory_space<vmem>>, %arg2: memref<32x16xbf16, #tpu.memory_space<vmem>>, %arg3: memref<2x32xf32, #tpu.memory_space<vmem>>, %arg4: memref<16x2xf32, #tpu.memory_space<vmem>>, %arg5: memref<1x16xf32, #tpu.memory_space<vmem>>, %arg6: memref<16x16xbf16, #tpu.memory_space<vmem>>) attributes {dimension_semantics = [#tpu.dimension_semantics<parallel>], iteration_bounds = array<i64: 2>, scalar_prefetch = 0 : i64, scratch_operands = 0 : i64, tpu.core_type = #tpu.core_type<tc>, window_params = [{transform_indices = @transform_0, window_bounds = array<i64: 16, 32>}, {pipeline_mode = #tpu.pipeline_mode<synchronous>, transform_indices = @transform_1, window_bounds = array<i64: 32, 16>}, {pipeline_mode = #tpu.pipeline_mode<synchronous>, transform_indices = @transform_2, window_bounds = array<i64: 2, 32>}, {transform_indices = @transform_3, window_bounds = array<i64: 16, 2>}, {pipeline_mode = #tpu.pipeline_mode<synchronous>, transform_indices = @transform_4, window_bounds = array<i64: 1, 16>}, {transform_indices = @transform_5, window_bounds = array<i64: 16, 16>}]} {
    %c0 = arith.constant 0 : index
    %c0_0 = arith.constant 0 : index
    %0 = vector.load %arg1[%c0, %c0_0] : memref<16x32xbf16, #tpu.memory_space<vmem>>, vector<16x32xbf16>
    %cst = arith.constant 0.000000e+00 : bf16
    %1 = vector.broadcast %cst : bf16 to vector<16x32xbf16>
    %2 = arith.cmpf ogt, %0, %1 : vector<16x32xbf16>
    %c0_1 = arith.constant 0 : index
    %c0_2 = arith.constant 0 : index
    %3 = vector.load %arg2[%c0_1, %c0_2] : memref<32x16xbf16, #tpu.memory_space<vmem>>, vector<32x16xbf16>
    %c0_3 = arith.constant 0 : index
    %c0_4 = arith.constant 0 : index
    %4 = vector.load %arg3[%c0_3, %c0_4] : memref<2x32xf32, #tpu.memory_space<vmem>>, vector<2x32xf32>
    %c0_5 = arith.constant 0 : index
    %c0_6 = arith.constant 0 : index
    %5 = vector.load %arg4[%c0_5, %c0_6] : memref<16x2xf32, #tpu.memory_space<vmem>>, vector<16x2xf32>
    %6 = vector.extract_strided_slice %5 {offsets = [0, 0], sizes = [16, 1], strides = [1, 1]} : vector<16x2xf32> to vector<16x1xf32>
    %7 = vector.extract_strided_slice %4 {offsets = [0, 0], sizes = [1, 32], strides = [1, 1]} : vector<2x32xf32> to vector<1x32xf32>
    %8 = vector.broadcast %6 : vector<16x1xf32> to vector<16x32xf32>
    %9 = vector.broadcast %7 : vector<1x32xf32> to vector<16x32xf32>
    %10 = arith.addf %8, %9 : vector<16x32xf32>
    %cst_7 = arith.constant 0.000000e+00 : f32
    %11 = vector.broadcast %cst_7 : f32 to vector<16x32xf32>
    %12 = arith.cmpf ogt, %10, %11 : vector<16x32xf32>
    %cst_8 = arith.constant 2.000000e-01 : f32
    %13 = vector.broadcast %cst_8 : f32 to vector<16x32xf32>
    %14 = arith.mulf %13, %10 : vector<16x32xf32>
    %15 = arith.select %12, %10, %14 : vector<16x32xi1>, vector<16x32xf32>
    %cst_9 = arith.constant -1.000000e+30 : f32
    %16 = vector.broadcast %cst_9 : f32 to vector<16x32xf32>
    %17 = arith.select %2, %15, %16 : vector<16x32xi1>, vector<16x32xf32>
    %cst_10 = arith.constant dense<0xFF800000> : vector<16xf32>
    %18 = vector.multi_reduction <maximumf>, %17, %cst_10 [1] : vector<16x32xf32> to vector<16xf32>
    %19 = vector.shape_cast %18 : vector<16xf32> to vector<16x1xf32>
    %20 = vector.broadcast %19 : vector<16x1xf32> to vector<16x32xf32>
    %21 = arith.subf %17, %20 : vector<16x32xf32>
    %22 = math.exp %21 : vector<16x32xf32>
    %cst_11 = arith.constant 0.000000e+00 : f32
    %23 = vector.broadcast %cst_11 : f32 to vector<16x32xf32>
    %24 = arith.select %2, %22, %23 : vector<16x32xi1>, vector<16x32xf32>
    %cst_12 = arith.constant dense<0.000000e+00> : vector<16xf32>
    %25 = vector.multi_reduction <add>, %24, %cst_12 [1] : vector<16x32xf32> to vector<16xf32>
    %26 = vector.shape_cast %25 : vector<16xf32> to vector<16x1xf32>
    %cst_13 = arith.constant 9.99999971E-10 : f32
    %27 = vector.broadcast %cst_13 : f32 to vector<16x1xf32>
    %28 = arith.maximumf %26, %27 : vector<16x1xf32>
    %29 = tpu.reciprocal %28 {approx = true} : vector<16x1xf32> -> vector<16x1xf32>
    %30 = vector.broadcast %29 : vector<16x1xf32> to vector<16x32xf32>
    %31 = arith.mulf %24, %30 : vector<16x32xf32>
    %32 = arith.truncf %31 : vector<16x32xf32> to vector<16x32xbf16>
    %33 = vector.extract_strided_slice %3 {offsets = [0, 0], sizes = [32, 8], strides = [1, 1]} : vector<32x16xbf16> to vector<32x8xbf16>
    %cst_14 = arith.constant dense<0.000000e+00> : vector<16x8xf32>
    %34 = tpu.matmul %32, %33, %cst_14 {dimension_numbers = #tpu.dot_dimension_numbers<[1], [0], [0], [1], [0, 0, 1, 1], [], []>} : vector<16x32xbf16>, vector<32x8xbf16>, vector<16x8xf32> -> vector<16x8xf32>
    %35 = vector.extract_strided_slice %5 {offsets = [0, 1], sizes = [16, 1], strides = [1, 1]} : vector<16x2xf32> to vector<16x1xf32>
    %36 = vector.extract_strided_slice %4 {offsets = [1, 0], sizes = [1, 32], strides = [1, 1]} : vector<2x32xf32> to vector<1x32xf32>
    %37 = vector.broadcast %35 : vector<16x1xf32> to vector<16x32xf32>
    %38 = vector.broadcast %36 : vector<1x32xf32> to vector<16x32xf32>
    %39 = arith.addf %37, %38 : vector<16x32xf32>
    %cst_15 = arith.constant 0.000000e+00 : f32
    %40 = vector.broadcast %cst_15 : f32 to vector<16x32xf32>
    %41 = arith.cmpf ogt, %39, %40 : vector<16x32xf32>
    %cst_16 = arith.constant 2.000000e-01 : f32
    %42 = vector.broadcast %cst_16 : f32 to vector<16x32xf32>
    %43 = arith.mulf %42, %39 : vector<16x32xf32>
    %44 = arith.select %41, %39, %43 : vector<16x32xi1>, vector<16x32xf32>
    %cst_17 = arith.constant -1.000000e+30 : f32
    %45 = vector.broadcast %cst_17 : f32 to vector<16x32xf32>
    %46 = arith.select %2, %44, %45 : vector<16x32xi1>, vector<16x32xf32>
    %cst_18 = arith.constant dense<0xFF800000> : vector<16xf32>
    %47 = vector.multi_reduction <maximumf>, %46, %cst_18 [1] : vector<16x32xf32> to vector<16xf32>
    %48 = vector.shape_cast %47 : vector<16xf32> to vector<16x1xf32>
    %49 = vector.broadcast %48 : vector<16x1xf32> to vector<16x32xf32>
    %50 = arith.subf %46, %49 : vector<16x32xf32>
    %51 = math.exp %50 : vector<16x32xf32>
    %cst_19 = arith.constant 0.000000e+00 : f32
    %52 = vector.broadcast %cst_19 : f32 to vector<16x32xf32>
    %53 = arith.select %2, %51, %52 : vector<16x32xi1>, vector<16x32xf32>
    %cst_20 = arith.constant dense<0.000000e+00> : vector<16xf32>
    %54 = vector.multi_reduction <add>, %53, %cst_20 [1] : vector<16x32xf32> to vector<16xf32>
    %55 = vector.shape_cast %54 : vector<16xf32> to vector<16x1xf32>
    %cst_21 = arith.constant 9.99999971E-10 : f32
    %56 = vector.broadcast %cst_21 : f32 to vector<16x1xf32>
    %57 = arith.maximumf %55, %56 : vector<16x1xf32>
    %58 = tpu.reciprocal %57 {approx = true} : vector<16x1xf32> -> vector<16x1xf32>
    %59 = vector.broadcast %58 : vector<16x1xf32> to vector<16x32xf32>
    %60 = arith.mulf %53, %59 : vector<16x32xf32>
    %61 = arith.truncf %60 : vector<16x32xf32> to vector<16x32xbf16>
    %62 = vector.extract_strided_slice %3 {offsets = [0, 8], sizes = [32, 8], strides = [1, 1]} : vector<32x16xbf16> to vector<32x8xbf16>
    %cst_22 = arith.constant dense<0.000000e+00> : vector<16x8xf32>
    %63 = tpu.matmul %61, %62, %cst_22 {dimension_numbers = #tpu.dot_dimension_numbers<[1], [0], [0], [1], [0, 0, 1, 1], [], []>} : vector<16x32xbf16>, vector<32x8xbf16>, vector<16x8xf32> -> vector<16x8xf32>
    %64 = tpu.concatenate %34, %63 in 1 : vector<16x8xf32>, vector<16x8xf32> -> vector<16x16xf32>
    %c0_23 = arith.constant 0 : index
    %c0_24 = arith.constant 0 : index
    %65 = vector.load %arg5[%c0_23, %c0_24] : memref<1x16xf32, #tpu.memory_space<vmem>>, vector<1x16xf32>
    %66 = vector.broadcast %65 : vector<1x16xf32> to vector<16x16xf32>
    %67 = arith.addf %64, %66 : vector<16x16xf32>
    %68 = arith.truncf %67 : vector<16x16xf32> to vector<16x16xbf16>
    %c0_25 = arith.constant 0 : index
    %c0_26 = arith.constant 0 : index
    %69 = vector.load %arg6[%c0_25, %c0_26] : memref<16x16xbf16, #tpu.memory_space<vmem>>, vector<16x16xbf16>
    tpu.vector_store %arg6[%c0_25, %c0_26], %68 {strides = array<i32>} : memref<16x16xbf16, #tpu.memory_space<vmem>>, vector<16x16xbf16>,
    return
  }
  func.func @transform_0(%arg0: i32) -> (i32, i32) {
    %c0_i32 = arith.constant 0 : i32
    %c0_i32_0 = arith.constant 0 : i32
    return %arg0, %c0_i32 : i32, i32
  }
  func.func @transform_1(%arg0: i32) -> (i32, i32) {
    %c0_i32 = arith.constant 0 : i32
    %c0_i32_0 = arith.constant 0 : i32
    %c0_i32_1 = arith.constant 0 : i32
    return %c0_i32, %c0_i32_0 : i32, i32
  }
  func.func @transform_2(%arg0: i32) -> (i32, i32) {
    %c0_i32 = arith.constant 0 : i32
    %c0_i32_0 = arith.constant 0 : i32
    %c0_i32_1 = arith.constant 0 : i32
    return %c0_i32, %c0_i32_0 : i32, i32
  }
  func.func @transform_3(%arg0: i32) -> (i32, i32) {
    %c0_i32 = arith.constant 0 : i32
    %c0_i32_0 = arith.constant 0 : i32
    return %arg0, %c0_i32 : i32, i32
  }
  func.func @transform_4(%arg0: i32) -> (i32, i32) {
    %c0_i32 = arith.constant 0 : i32
    %c0_i32_0 = arith.constant 0 : i32
    %c0_i32_1 = arith.constant 0 : i32
    return %c0_i32, %c0_i32_0 : i32, i32
  }
  func.func @transform_5(%arg0: i32) -> (i32, i32) {
    %c0_i32 = arith.constant 0 : i32
    %c0_i32_0 = arith.constant 0 : i32
    return %arg0, %c0_i32 : i32, i32
  }
}

module attributes {stable_mosaic.version = 11 : i64} {
  func.func @gat_attn_kernel(%arg0: i32, %arg1: memref<16x32xbf16, #tpu.memory_space<vmem>>, %arg2: memref<32x4xbf16, #tpu.memory_space<vmem>>, %arg3: memref<1x32xf32, #tpu.memory_space<vmem>>, %arg4: memref<16x1xf32, #tpu.memory_space<vmem>>, %arg5: memref<1x4xf32, #tpu.memory_space<vmem>>, %arg6: memref<16x4xf32, #tpu.memory_space<vmem>>) attributes {dimension_semantics = [#tpu.dimension_semantics<parallel>], iteration_bounds = array<i64: 2>, scalar_prefetch = 0 : i64, scratch_operands = 0 : i64, tpu.core_type = #tpu.core_type<tc>, window_params = [{transform_indices = @transform_0, window_bounds = array<i64: 16, 32>}, {pipeline_mode = #tpu.pipeline_mode<synchronous>, transform_indices = @transform_1, window_bounds = array<i64: 32, 4>}, {pipeline_mode = #tpu.pipeline_mode<synchronous>, transform_indices = @transform_2, window_bounds = array<i64: 1, 32>}, {transform_indices = @transform_3, window_bounds = array<i64: 16, 1>}, {pipeline_mode = #tpu.pipeline_mode<synchronous>, transform_indices = @transform_4, window_bounds = array<i64: 1, 4>}, {transform_indices = @transform_5, window_bounds = array<i64: 16, 4>}]} {
    %c0 = arith.constant 0 : index
    %c0_0 = arith.constant 0 : index
    %0 = vector.load %arg1[%c0, %c0_0] : memref<16x32xbf16, #tpu.memory_space<vmem>>, vector<16x32xbf16>
    %cst = arith.constant 0.000000e+00 : bf16
    %1 = vector.broadcast %cst : bf16 to vector<16x32xbf16>
    %2 = arith.cmpf ogt, %0, %1 : vector<16x32xbf16>
    %c0_1 = arith.constant 0 : index
    %c0_2 = arith.constant 0 : index
    %3 = vector.load %arg2[%c0_1, %c0_2] : memref<32x4xbf16, #tpu.memory_space<vmem>>, vector<32x4xbf16>
    %c0_3 = arith.constant 0 : index
    %c0_4 = arith.constant 0 : index
    %4 = vector.load %arg3[%c0_3, %c0_4] : memref<1x32xf32, #tpu.memory_space<vmem>>, vector<1x32xf32>
    %c0_5 = arith.constant 0 : index
    %c0_6 = arith.constant 0 : index
    %5 = vector.load %arg4[%c0_5, %c0_6] : memref<16x1xf32, #tpu.memory_space<vmem>>, vector<16x1xf32>
    %6 = vector.broadcast %5 : vector<16x1xf32> to vector<16x32xf32>
    %7 = vector.broadcast %4 : vector<1x32xf32> to vector<16x32xf32>
    %8 = arith.addf %6, %7 : vector<16x32xf32>
    %cst_7 = arith.constant 0.000000e+00 : f32
    %9 = vector.broadcast %cst_7 : f32 to vector<16x32xf32>
    %10 = arith.cmpf ogt, %8, %9 : vector<16x32xf32>
    %cst_8 = arith.constant 2.000000e-01 : f32
    %11 = vector.broadcast %cst_8 : f32 to vector<16x32xf32>
    %12 = arith.mulf %11, %8 : vector<16x32xf32>
    %13 = arith.select %10, %8, %12 : vector<16x32xi1>, vector<16x32xf32>
    %cst_9 = arith.constant -1.000000e+30 : f32
    %14 = vector.broadcast %cst_9 : f32 to vector<16x32xf32>
    %15 = arith.select %2, %13, %14 : vector<16x32xi1>, vector<16x32xf32>
    %cst_10 = arith.constant dense<0xFF800000> : vector<16xf32>
    %16 = vector.multi_reduction <maximumf>, %15, %cst_10 [1] : vector<16x32xf32> to vector<16xf32>
    %17 = vector.shape_cast %16 : vector<16xf32> to vector<16x1xf32>
    %18 = vector.broadcast %17 : vector<16x1xf32> to vector<16x32xf32>
    %19 = arith.subf %15, %18 : vector<16x32xf32>
    %20 = math.exp %19 : vector<16x32xf32>
    %cst_11 = arith.constant 0.000000e+00 : f32
    %21 = vector.broadcast %cst_11 : f32 to vector<16x32xf32>
    %22 = arith.select %2, %20, %21 : vector<16x32xi1>, vector<16x32xf32>
    %cst_12 = arith.constant dense<0.000000e+00> : vector<16xf32>
    %23 = vector.multi_reduction <add>, %22, %cst_12 [1] : vector<16x32xf32> to vector<16xf32>
    %24 = vector.shape_cast %23 : vector<16xf32> to vector<16x1xf32>
    %cst_13 = arith.constant 9.99999971E-10 : f32
    %25 = vector.broadcast %cst_13 : f32 to vector<16x1xf32>
    %26 = arith.maximumf %24, %25 : vector<16x1xf32>
    %27 = tpu.reciprocal %26 {approx = true} : vector<16x1xf32> -> vector<16x1xf32>
    %28 = vector.broadcast %27 : vector<16x1xf32> to vector<16x32xf32>
    %29 = arith.mulf %22, %28 : vector<16x32xf32>
    %30 = arith.truncf %29 : vector<16x32xf32> to vector<16x32xbf16>
    %cst_14 = arith.constant dense<0.000000e+00> : vector<16x4xf32>
    %31 = tpu.matmul %30, %3, %cst_14 {dimension_numbers = #tpu.dot_dimension_numbers<[1], [0], [0], [1], [0, 0, 1, 1], [], []>} : vector<16x32xbf16>, vector<32x4xbf16>, vector<16x4xf32> -> vector<16x4xf32>
    %c0_15 = arith.constant 0 : index
    %c0_16 = arith.constant 0 : index
    %32 = vector.load %arg5[%c0_15, %c0_16] : memref<1x4xf32, #tpu.memory_space<vmem>>, vector<1x4xf32>
    %33 = vector.broadcast %32 : vector<1x4xf32> to vector<16x4xf32>
    %34 = arith.addf %31, %33 : vector<16x4xf32>
    %c0_17 = arith.constant 0 : index
    %c0_18 = arith.constant 0 : index
    %35 = vector.load %arg6[%c0_17, %c0_18] : memref<16x4xf32, #tpu.memory_space<vmem>>, vector<16x4xf32>
    tpu.vector_store %arg6[%c0_17, %c0_18], %34 {strides = array<i32>} : memref<16x4xf32, #tpu.memory_space<vmem>>, vector<16x4xf32>,
    return
  }
  func.func @transform_0(%arg0: i32) -> (i32, i32) {
    %c0_i32 = arith.constant 0 : i32
    %c0_i32_0 = arith.constant 0 : i32
    return %arg0, %c0_i32 : i32, i32
  }
  func.func @transform_1(%arg0: i32) -> (i32, i32) {
    %c0_i32 = arith.constant 0 : i32
    %c0_i32_0 = arith.constant 0 : i32
    %c0_i32_1 = arith.constant 0 : i32
    return %c0_i32, %c0_i32_0 : i32, i32
  }
  func.func @transform_2(%arg0: i32) -> (i32, i32) {
    %c0_i32 = arith.constant 0 : i32
    %c0_i32_0 = arith.constant 0 : i32
    %c0_i32_1 = arith.constant 0 : i32
    return %c0_i32, %c0_i32_0 : i32, i32
  }
  func.func @transform_3(%arg0: i32) -> (i32, i32) {
    %c0_i32 = arith.constant 0 : i32
    %c0_i32_0 = arith.constant 0 : i32
    return %arg0, %c0_i32 : i32, i32
  }
  func.func @transform_4(%arg0: i32) -> (i32, i32) {
    %c0_i32 = arith.constant 0 : i32
    %c0_i32_0 = arith.constant 0 : i32
    %c0_i32_1 = arith.constant 0 : i32
    return %c0_i32, %c0_i32_0 : i32, i32
  }
  func.func @transform_5(%arg0: i32) -> (i32, i32) {
    %c0_i32 = arith.constant 0 : i32
    %c0_i32_0 = arith.constant 0 : i32
    return %arg0, %c0_i32 : i32, i32
  }
}

</mosaic_0001>

<llo_original>
// kernel: gatnet_forward.6
$region0: #{gatnet_forward.6}
  #allocation0 [shape = 'u32[]', space=smem, size = 0x4, offset = 0x4, fixed_abs, tag = 'smem constant byte address 0x4 - core index']
  #allocation1 [shape = 'u32[144,128]{1,0:T(1,128)}', space=vmem, size = 0x12000, scoped, tag = 'internal scratch']
  %s0 = inlined_call_operand.vmem [shape: bf16[32,16], index: 0, kind: input, shape index: {}]
  %s1 = inlined_call_operand.vmem [shape: bf16[16,4], index: 1, kind: input, shape index: {}]
  %s2 = inlined_call_operand.vmem [shape: f32[4,1], index: 2, kind: input, shape index: {}]
  %s3 = inlined_call_operand.vmem [shape: f32[4,1], index: 3, kind: input, shape index: {}]
  %s4 = inlined_call_operand.vmem [shape: bf16[32,4], index: 4, kind: output, shape index: {0}]
  %s5 = inlined_call_operand.vmem [shape: f32[32,1], index: 5, kind: output, shape index: {1}]
  %s6 = inlined_call_operand.vmem [shape: f32[32,1], index: 6, kind: output, shape index: {2}]
  %7 = xla_tuple %s4, %s5, %s6
  %s8 = sld [smem:[#allocation0]]
  $region65: #{gatnet_forward.6} parent=0
    _
  %s10 = ssub.s32 1, %s8
  %s11 = scalar_select 0, %s10, %s8
  loop: start=0, step=1, limit=4
  $region2: #{gatnet_forward.6} parent=0 // loop_pre_header
    _
  $region3: #{gatnet_forward.6} parent=0 // loop_header
    %s13 = sphi 0, %s17
    %p14 = scmp.ge.s32.totalorder %s13, 4
    %s23 = sphi 0, %s25
    %s26 = sphi 0, %s23
    %s27 = sphi 0, %s26
    %s43 = sphi 0, %s27
    %s47 = sphi 0, %s47
    %s49 = sphi 0, %s47
    %s50 = sphi 0, %s49
    %s64 = sphi 0, %s50
    %s68 = sphi 0, %s68
    %s70 = sphi 0, %s68
    %s71 = sphi 0, %s70
    %s85 = sphi 0, %s71
    %s89 = sphi 0, %s89
    %s91 = sphi 0, %s89
    %s92 = sphi 0, %s91
    %s106 = sphi 0, %s92
    %s112 = sphi 0, %s114
    %s115 = sphi 0, %s112
    %s116 = sphi 0, %s115
    %s132 = sphi 0, %s116
    %s138 = sphi 0, %s140
    %s141 = sphi 0, %s138
    %s142 = sphi 0, %s141
    %s158 = sphi 0, %s142
    %s164 = sphi 0, %s166
    %s167 = sphi 0, %s164
    %s168 = sphi 0, %s167
    %s184 = sphi 0, %s168
  $region4: #{gatnet_forward.6} parent=0 // loop_header_branch
    %16 = sbr.rel (%p14) target = $region8
  $region5: #{gatnet_forward.6} parent=0 // loop_body
    %s18 = ssub.s32 %s13, 1
    %s19 = ssub.s32 %s13, 2
    %s20 = sadd.s32 %s13, 1
    %s21 = ssub.s32 %s13, %s20
    %p22 = scmp.eq.s32.totalorder %s21, 0
    %s24 = sadd.s32 %s23, 1
    %s25 = scalar_select %p22, %s23, %s24
    %p28 = pneg %p22
    %p29 = scmp.eq.s32.totalorder %s13, 1
    %p30 = por %p28, %p29
    %p31 = scmp.ne.s32.totalorder %s23, %s26
    %p32 = scmp.eq.s32.totalorder %s13, 0
    %p33 = por %p31, %p32
    %p34 = scmp.ne.s32.totalorder %s23, %s26
    %p35 = scmp.eq.s32.totalorder %s18, 1
    %p36 = por %p34, %p35
    %p37 = scmp.ne.s32.totalorder %s26, %s27
    %p38 = scmp.eq.s32.totalorder %s18, 0
    %p39 = por %p37, %p38
    %p40 = scmp.ne.s32.totalorder %s26, %s27
    %p41 = scmp.eq.s32.totalorder %s19, 1
    %p42 = por %p40, %p41
    %p44 = scmp.ne.s32.totalorder %s27, %s43
    %p45 = scmp.eq.s32.totalorder %s19, 0
    %p46 = por %p44, %p45
    %s48 = sadd.s32 %s47, 1
    %p51 = scmp.eq.s32.totalorder %s13, 1
    %p52 = scmp.ne.s32.totalorder %s47, %s49
    %p53 = scmp.eq.s32.totalorder %s13, 0
    %p54 = por %p52, %p53
    %p55 = scmp.ne.s32.totalorder %s47, %s49
    %p56 = scmp.eq.s32.totalorder %s18, 1
    %p57 = por %p55, %p56
    %p58 = scmp.ne.s32.totalorder %s49, %s50
    %p59 = scmp.eq.s32.totalorder %s18, 0
    %p60 = por %p58, %p59
    %p61 = scmp.ne.s32.totalorder %s49, %s50
    %p62 = scmp.eq.s32.totalorder %s19, 1
    %p63 = por %p61, %p62
    %p65 = scmp.ne.s32.totalorder %s50, %s64
    %p66 = scmp.eq.s32.totalorder %s19, 0
    %p67 = por %p65, %p66
    %s69 = sadd.s32 %s68, 1
    %p72 = scmp.eq.s32.totalorder %s13, 1
    %p73 = scmp.ne.s32.totalorder %s68, %s70
    %p74 = scmp.eq.s32.totalorder %s13, 0
    %p75 = por %p73, %p74
    %p76 = scmp.ne.s32.totalorder %s68, %s70
    %p77 = scmp.eq.s32.totalorder %s18, 1
    %p78 = por %p76, %p77
    %p79 = scmp.ne.s32.totalorder %s70, %s71
    %p80 = scmp.eq.s32.totalorder %s18, 0
    %p81 = por %p79, %p80
    %p82 = scmp.ne.s32.totalorder %s70, %s71
    %p83 = scmp.eq.s32.totalorder %s19, 1
    %p84 = por %p82, %p83
    %p86 = scmp.ne.s32.totalorder %s71, %s85
    %p87 = scmp.eq.s32.totalorder %s19, 0
    %p88 = por %p86, %p87
    %s90 = sadd.s32 %s89, 1
    %p93 = scmp.eq.s32.totalorder %s13, 1
    %p94 = scmp.ne.s32.totalorder %s89, %s91
    %p95 = scmp.eq.s32.totalorder %s13, 0
    %p96 = por %p94, %p95
    %p97 = scmp.ne.s32.totalorder %s89, %s91
    %p98 = scmp.eq.s32.totalorder %s18, 1
    %p99 = por %p97, %p98
    %p100 = scmp.ne.s32.totalorder %s91, %s92
    %p101 = scmp.eq.s32.totalorder %s18, 0
    %p102 = por %p100, %p101
    %p103 = scmp.ne.s32.totalorder %s91, %s92
    %p104 = scmp.eq.s32.totalorder %s19, 1
    %p105 = por %p103, %p104
    %p107 = scmp.ne.s32.totalorder %s92, %s106
    %p108 = scmp.eq.s32.totalorder %s19, 0
    %p109 = por %p107, %p108
    %s110 = ssub.s32 %s13, %s20
    %p111 = scmp.eq.s32.totalorder %s110, 0
    %s113 = sadd.s32 %s112, 1
    %s114 = scalar_select %p111, %s112, %s113
    %p117 = pneg %p111
    %p118 = scmp.eq.s32.totalorder %s13, 1
    %p119 = por %p117, %p118
    %p120 = scmp.ne.s32.totalorder %s112, %s115
    %p121 = scmp.eq.s32.totalorder %s13, 0
    %p122 = por %p120, %p121
    %p123 = scmp.ne.s32.totalorder %s112, %s115
    %p124 = scmp.eq.s32.totalorder %s18, 1
    %p125 = por %p123, %p124
    %p126 = scmp.ne.s32.totalorder %s115, %s116
    %p127 = scmp.eq.s32.totalorder %s18, 0
    %p128 = por %p126, %p127
    %p129 = scmp.ne.s32.totalorder %s115, %s116
    %p130 = scmp.eq.s32.totalorder %s19, 1
    %p131 = por %p129, %p130
    %p133 = scmp.ne.s32.totalorder %s116, %s132
    %p134 = scmp.eq.s32.totalorder %s19, 0
    %p135 = por %p133, %p134
    %s136 = ssub.s32 %s13, %s20
    %p137 = scmp.eq.s32.totalorder %s136, 0
    %s139 = sadd.s32 %s138, 1
    %s140 = scalar_select %p137, %s138, %s139
    %p143 = pneg %p137
    %p144 = scmp.eq.s32.totalorder %s13, 1
    %p145 = por %p143, %p144
    %p146 = scmp.ne.s32.totalorder %s138, %s141
    %p147 = scmp.eq.s32.totalorder %s13, 0
    %p148 = por %p146, %p147
    %p149 = scmp.ne.s32.totalorder %s138, %s141
    %p150 = scmp.eq.s32.totalorder %s18, 1
    %p151 = por %p149, %p150
    %p152 = scmp.ne.s32.totalorder %s141, %s142
    %p153 = scmp.eq.s32.totalorder %s18, 0
    %p154 = por %p152, %p153
    %p155 = scmp.ne.s32.totalorder %s141, %s142
    %p156 = scmp.eq.s32.totalorder %s19, 1
    %p157 = por %p155, %p156
    %p159 = scmp.ne.s32.totalorder %s142, %s158
    %p160 = scmp.eq.s32.totalorder %s19, 0
    %p161 = por %p159, %p160
    %s162 = ssub.s32 %s13, %s20
    %p163 = scmp.eq.s32.totalorder %s162, 0
    %s165 = sadd.s32 %s164, 1
    %s166 = scalar_select %p163, %s164, %s165
    %p169 = pneg %p163
    %p170 = scmp.eq.s32.totalorder %s13, 1
    %p171 = por %p169, %p170
    %p172 = scmp.ne.s32.totalorder %s164, %s167
    %p173 = scmp.eq.s32.totalorder %s13, 0
    %p174 = por %p172, %p173
    %p175 = scmp.ne.s32.totalorder %s164, %s167
    %p176 = scmp.eq.s32.totalorder %s18, 1
    %p177 = por %p175, %p176
    %p178 = scmp.ne.s32.totalorder %s167, %s168
    %p179 = scmp.eq.s32.totalorder %s18, 0
    %p180 = por %p178, %p179
    %p181 = scmp.ne.s32.totalorder %s167, %s168
    %p182 = scmp.eq.s32.totalorder %s19, 1
    %p183 = por %p181, %p182
    %p185 = scmp.ne.s32.totalorder %s168, %s184
    %p186 = scmp.eq.s32.totalorder %s19, 0
    %p187 = por %p185, %p186
    %p188 = scmp.le.s32.totalorder 1, %s13
    %p189 = scmp.lt.s32.totalorder %s13, 3
    %p190 = pnand %p188, %p189
    %p191 = pneg %p190
    // Predicated region
    $region9: #{gatnet_forward.6} parent=5 // pred_check
      _
    $region10: #{gatnet_forward.6} parent=5 // pred_check_branch
      %193 = sbr.rel (%p190) target = $region12
    $region11: #{gatnet_forward.6} parent=5 // pred_region
      %s194 = ssub.s32 %s13, 1
      // Predicated region
      $region13: #{gatnet_forward.6} parent=11 // pred_check
        %p195 = pneg %p60
      $region14: #{gatnet_forward.6} parent=11 // pred_check_branch
        %197 = sbr.rel (%p195) target = $region16
      $region15: #{gatnet_forward.6} parent=11 // pred_region
        _
      $region16: #{gatnet_forward.6} parent=11 // pred_fallthru
        _
      // Predicated region
      $region17: #{gatnet_forward.6} parent=11 // pred_check
        %p198 = pneg %p81
      $region18: #{gatnet_forward.6} parent=11 // pred_check_branch
        %200 = sbr.rel (%p198) target = $region20
      $region19: #{gatnet_forward.6} parent=11 // pred_region
        _
      $region20: #{gatnet_forward.6} parent=11 // pred_fallthru
        _
      // Predicated region
      $region21: #{gatnet_forward.6} parent=11 // pred_check
        %p201 = pneg %p102
      $region22: #{gatnet_forward.6} parent=11 // pred_check_branch
        %203 = sbr.rel (%p201) target = $region24
      $region23: #{gatnet_forward.6} parent=11 // pred_region
        _
      $region24: #{gatnet_forward.6} parent=11 // pred_fallthru
        _
    $region12: #{gatnet_forward.6} parent=5 // pred_fallthru
      _
    %p204 = scmp.lt.s32.totalorder %s13, 2
    // Predicated region
    $region25: #{gatnet_forward.6} parent=5 // pred_check
      %p205 = pneg %p204
    $region26: #{gatnet_forward.6} parent=5 // pred_check_branch
      %207 = sbr.rel (%p205) target = $region28
    $region27: #{gatnet_forward.6} parent=5 // pred_region
      // Predicated region
      $region29: #{gatnet_forward.6} parent=27 // pred_check
        %p208 = pneg %p33
      $region30: #{gatnet_forward.6} parent=27 // pred_check_branch
        %210 = sbr.rel (%p208) target = $region32
      $region31: #{gatnet_forward.6} parent=27 // pred_region
        %s211 = smul.u32 2, %s13
        %p212 = scmp.lt.s32.totalorder %s211, 3
        %s213 = scalar_select %p212, %s211, 3
        %s214 = smul.addr %s213, 4
        %s215 = scalar_lea.vmem %s0, %s214
        %s216 = smul.u32 2, %s13
      $region32: #{gatnet_forward.6} parent=27 // pred_fallthru
        _
    $region28: #{gatnet_forward.6} parent=5 // pred_fallthru
      _
    %p217 = scmp.le.s32.totalorder 1, %s13
    %p218 = scmp.lt.s32.totalorder %s13, 3
    %p219 = pnand %p217, %p218
    %p220 = pneg %p219
    // Predicated region
    $region33: #{gatnet_forward.6} parent=5 // pred_check
      _
    $region34: #{gatnet_forward.6} parent=5 // pred_check_branch
      %222 = sbr.rel (%p219) target = $region36
    $region35: #{gatnet_forward.6} parent=5 // pred_region
      %s223 = ssub.s32 %s13, 1
      %s224 = smul.u32 2, %s18
      %p225 = scmp.lt.s32.totalorder %s224, 3
      %s226 = scalar_select %p225, %s224, 3
      %s227 = smul.addr %s226, 4
      %s228 = scalar_lea.vmem %s0, %s227
      %p229 = pneg %p39
      %p230 = pneg %p36
      %p231 = pneg %p60
      %p232 = pneg %p57
      %p233 = pneg %p81
      %p234 = pneg %p78
      %p235 = pneg %p102
      %p236 = pneg %p99
      %p237 = pneg %p128
      %p238 = pneg %p125
      %s239 = smul.u32 2, %s18
      %p240 = scmp.lt.s32.totalorder %s239, 3
      %s241 = scalar_select %p240, %s239, 3
      %s242 = smul.addr %s241, 4
      %s243 = scalar_lea.vmem %s4, %s242
      %p244 = pneg %p154
      %p245 = pneg %p151
      %s246 = smul.u32 2, %s18
      %p247 = scmp.lt.s32.totalorder %s246, 3
      %s248 = scalar_select %p247, %s246, 3
      %s249 = smul.addr %s248, 8
      %s250 = scalar_lea.vmem %s5, %s249
      %p251 = pneg %p180
      %p252 = pneg %p177
      %s253 = smul.u32 2, %s18
      %p254 = scmp.lt.s32.totalorder %s253, 3
      %s255 = scalar_select %p254, %s253, 3
      %s256 = smul.addr %s255, 8
      %s257 = scalar_lea.vmem %s6, %s256
      %s258 = smul.u32 2, %s18
      %p259 = scmp.lt.s32.totalorder %s258, 3
      %s260 = scalar_select %p259, %s258, 3
      %s261 = smul.addr %s260, 4
      %s262 = scalar_lea.vmem %s0, %s261
      %s263 = smul.u32 2, %s18
      %s264 = smul.u32 2, %s18
      %p265 = scmp.lt.s32.totalorder %s264, 3
      %s266 = scalar_select %p265, %s264, 3
      %s267 = smul.addr %s266, 4
      %s268 = scalar_lea.vmem %s4, %s267
      %s269 = smul.u32 2, %s18
      %s270 = smul.u32 2, %s18
      %p271 = scmp.lt.s32.totalorder %s270, 3
      %s272 = scalar_select %p271, %s270, 3
      %s273 = smul.addr %s272, 8
      %s274 = scalar_lea.vmem %s5, %s273
      %s275 = smul.u32 2, %s18
      %s276 = smul.u32 2, %s18
      %p277 = scmp.lt.s32.totalorder %s276, 3
      %s278 = scalar_select %p277, %s276, 3
      %s279 = smul.addr %s278, 8
      %s280 = scalar_lea.vmem %s6, %s279
      %s281 = smul.u32 2, %s18
      %v283 = vld [vmem:[%s262] sm:$0xf]
      %v284 = vld [vmem:[%s262 + $0x4] sm:$0xf]
      %v285 = vunpack.c.l.bf16 %v283
      %v286 = vunpack.c.l.bf16 %v284
      %vm287 = vcmp.gt.f32.partialorder %v285, 0.0
      %vm288 = vcmp.gt.f32.partialorder %v286, 0.0
      %v289 = vmul.f32 %v285, 1.442695
      %v290 = vpow.pop %v289
      %v291 = vmul.f32 %v286, 1.442695
      %v292 = vpow.pop %v291
      %v293 = vsub.f32 %v290, 1.0
      %v294 = vsub.f32 %v292, 1.0
      %v295 = vsel %vm287, %v285, %v293
      %v296 = vsel %vm288, %v286, %v294
      %v297 = vpack.c.bf16 %v296, %v295
      %v298 = vld [vmem:[%s1] sm:$0xf]
      %v299 = vld [vmem:[%s1 + $0x4] sm:$0xf]
      %v302 = vunpack.c.l.b16 %v298
      %v303 = vunpack.c.l.b16 %v299
      %v304 = vpack.c.b16 %v303, %v302
      %vm306 = vcmask 130048
      %v308 = vsel %vm306, %v297, 0
      %310 = vmatprep.subr.bf16.mxu0 0
      %311 = vmatpush1.bf16.msra.mxu0 0
      %312 = vmatprep.subr.bf16.mxu0 0
      %313 = vmatpush1.bf16.msra.mxu0 0
      %314 = vmatprep.subr.bf16.mxu0 0
      %315 = vmatpush1.bf16.msra.mxu0 0
      %316 = vmatprep.subr.bf16.mxu0 0
      %317 = vmatpush1.bf16.msra.mxu0 0
      %318 = vmatprep.subr.bf16.mxu0 0
      %319 = vmatpush1.bf16.msra.mxu0 0
      %320 = vmatprep.subr.bf16.mxu0 0
      %321 = vmatpush1.bf16.msra.mxu0 0
      %322 = vmatprep.subr.bf16.mxu0 0
      %323 = vmatpush1.bf16.msra.mxu0 0
      %324 = vmatprep.subr.bf16.mxu0 0
      %325 = vmatpush1.bf16.msra.mxu0 %v304
      %326 = vmatprep.subr.bf16.mxu0 0
      %327 = vmatpush2.bf16.msra.mxu0 0
      %328 = vmatprep.subr.bf16.mxu0 0
      %329 = vmatpush2.bf16.msra.mxu0 0
      %330 = vmatprep.subr.bf16.mxu0 0
      %331 = vmatpush2.bf16.msra.mxu0 0
      %332 = vmatprep.subr.bf16.mxu0 0
      %333 = vmatpush2.bf16.msra.mxu0 0
      %334 = vmatprep.subr.bf16.mxu0 0
      %335 = vmatpush2.bf16.msra.mxu0 0
      %336 = vmatprep.subr.bf16.mxu0 0
      %337 = vmatpush2.bf16.msra.mxu0 0
      %338 = vmatprep.subr.bf16.mxu0 0
      %339 = vmatpush2.bf16.msra.mxu0 0
      %340 = vmatprep.subr.bf16.mxu0 0
      %341 = vmatpush2.bf16.msra.mxu0 0
      %342 = vmatprep.mubr.bf16.mxu0 0
      %343 = vmatmul.mubr.bf16.gmra.mxu0 %v308
      %v344 = vpop.f32.mrf.mxu0
      %v345 = vadd.f32 0.0, %v344
      %v346 = vpop.f32.mrf.mxu0
      %v347 = vpop.f32.mrf.mxu0
      %v348 = vadd.f32 0.0, %v347
      %v349 = vpop.f32.mrf.mxu0
      %350 = vdwg.mxu0
      %v351 = vld [vmem:[%s2] sm:$0xf]
      %vm352 = vcmask 31744
      %v354 = vsel %vm352, %v345, 0
      %v357 = vsel %vm352, %v348, 0
      %vm359 = vcmask 1043456
      %v361 = vsel %vm359, %v351, 0
      %363 = vmatprep.subr.mxu0 0.0
      %364 = vmatpush1.msra.mxu0 0.0
      %365 = vmatprep.subr.mxu0 0.0
      %366 = vmatpush1.msra.mxu0 0.0
      %367 = vmatprep.subr.mxu0 0.0
      %368 = vmatpush1.msra.mxu0 0.0
      %369 = vmatprep.subr.mxu0 0.0
      %370 = vmatpush1.msra.mxu0 0.0
      %371 = vmatprep.subr.mxu0 0.0
      %372 = vmatpush1.msra.mxu0 0.0
      %373 = vmatprep.subr.mxu0 0.0
      %374 = vmatpush1.msra.mxu0 0.0
      %375 = vmatprep.subr.mxu0 0.0
      %376 = vmatpush1.msra.mxu0 0.0
      %377 = vmatprep.subr.mxu0 0.0
      %378 = vmatpush1.msra.mxu0 0.0
      %379 = vmatprep.subr.mxu0 0.0
      %380 = vmatpush1.msra.mxu0 0.0
      %381 = vmatprep.subr.mxu0 0.0
      %382 = vmatpush1.msra.mxu0 0.0
      %383 = vmatprep.subr.mxu0 0.0
      %384 = vmatpush1.msra.mxu0 0.0
      %385 = vmatprep.subr.mxu0 0.0
      %386 = vmatpush1.msra.mxu0 0.0
      %387 = vmatprep.subr.mxu0 0.0
      %388 = vmatpush1.msra.mxu0 0.0
      %389 = vmatprep.subr.mxu0 0.0
      %390 = vmatpush1.msra.mxu0 0.0
      %391 = vmatprep.subr.mxu0 0.0
      %392 = vmatpush1.msra.mxu0 0.0
      %393 = vmatprep.subr.mxu0 0.0
      %394 = vmatpush1.msra.mxu0 %v361
      %395 = vmatprep.subr.mxu0 0.0
      %396 = vmatpush2.msra.mxu0 0.0
      %397 = vmatprep.subr.mxu0 0.0
      %398 = vmatpush2.msra.mxu0 0.0
      %399 = vmatprep.subr.mxu0 0.0
      %400 = vmatpush2.msra.mxu0 0.0
      %401 = vmatprep.subr.mxu0 0.0
      %402 = vmatpush2.msra.mxu0 0.0
      %403 = vmatprep.subr.mxu0 0.0
      %404 = vmatpush2.msra.mxu0 0.0
      %405 = vmatprep.subr.mxu0 0.0
      %406 = vmatpush2.msra.mxu0 0.0
      %407 = vmatprep.subr.mxu0 0.0
      %408 = vmatpush2.msra.mxu0 0.0
      %409 = vmatprep.subr.mxu0 0.0
      %410 = vmatpush2.msra.mxu0 0.0
      %411 = vmatprep.subr.mxu0 0.0
      %412 = vmatpush2.msra.mxu0 0.0
      %413 = vmatprep.subr.mxu0 0.0
      %414 = vmatpush2.msra.mxu0 0.0
      %415 = vmatprep.subr.mxu0 0.0
      %416 = vmatpush2.msra.mxu0 0.0
      %417 = vmatprep.subr.mxu0 0.0
      %418 = vmatpush2.msra.mxu0 0.0
      %419 = vmatprep.subr.mxu0 0.0
      %420 = vmatpush2.msra.mxu0 0.0
      %421 = vmatprep.subr.mxu0 0.0
      %422 = vmatpush2.msra.mxu0 0.0
      %423 = vmatprep.subr.mxu0 0.0
      %424 = vmatpush2.msra.mxu0 0.0
      %425 = vmatprep.subr.mxu0 0.0
      %426 = vmatpush2.msra.mxu0 0.0
      %427 = vmatprep.mubr.f32.mxu0 0.0
      %428 = vmatmul.mubr.f32.gmra.mxu0 %v354
      %v429 = vpop.f32.mrf.mxu0
      %v430 = vadd.f32 0.0, %v429
      %v431 = vpop.f32.mrf.mxu0
      %432 = vmatprep.mubr.f32.mxu0 0.0
      %433 = vmatmul.mubr.f32.gmra.mxu0 %v357
      %v434 = vpop.f32.mrf.mxu0
      %v435 = vadd.f32 0.0, %v434
      %v436 = vpop.f32.mrf.mxu0
      %437 = vdwg.mxu0
      %vm438 = vcmask 7168
      %439 = vst.msk [vmem:[%s274] sm:$0xff] %vm438, %v430
      %440 = vst.msk [vmem:[%s274 + $0x8] sm:$0xff] %vm438, %v435
      %v441 = vld [vmem:[%s3] sm:$0xf]
      %v443 = vsel %vm359, %v441, 0
      %445 = vmatprep.subr.mxu0 0.0
      %446 = vmatpush1.msra.mxu0 0.0
      %447 = vmatprep.subr.mxu0 0.0
      %448 = vmatpush1.msra.mxu0 0.0
      %449 = vmatprep.subr.mxu0 0.0
      %450 = vmatpush1.msra.mxu0 0.0
      %451 = vmatprep.subr.mxu0 0.0
      %452 = vmatpush1.msra.mxu0 0.0
      %453 = vmatprep.subr.mxu0 0.0
      %454 = vmatpush1.msra.mxu0 0.0
      %455 = vmatprep.subr.mxu0 0.0
      %456 = vmatpush1.msra.mxu0 0.0
      %457 = vmatprep.subr.mxu0 0.0
      %458 = vmatpush1.msra.mxu0 0.0
      %459 = vmatprep.subr.mxu0 0.0
      %460 = vmatpush1.msra.mxu0 0.0
      %461 = vmatprep.subr.mxu0 0.0
      %462 = vmatpush1.msra.mxu0 0.0
      %463 = vmatprep.subr.mxu0 0.0
      %464 = vmatpush1.msra.mxu0 0.0
      %465 = vmatprep.subr.mxu0 0.0
      %466 = vmatpush1.msra.mxu0 0.0
      %467 = vmatprep.subr.mxu0 0.0
      %468 = vmatpush1.msra.mxu0 0.0
      %469 = vmatprep.subr.mxu0 0.0
      %470 = vmatpush1.msra.mxu0 0.0
      %471 = vmatprep.subr.mxu0 0.0
      %472 = vmatpush1.msra.mxu0 0.0
      %473 = vmatprep.subr.mxu0 0.0
      %474 = vmatpush1.msra.mxu0 0.0
      %475 = vmatprep.subr.mxu0 0.0
      %476 = vmatpush1.msra.mxu0 %v443
      %477 = vmatprep.subr.mxu0 0.0
      %478 = vmatpush2.msra.mxu0 0.0
      %479 = vmatprep.subr.mxu0 0.0
      %480 = vmatpush2.msra.mxu0 0.0
      %481 = vmatprep.subr.mxu0 0.0
      %482 = vmatpush2.msra.mxu0 0.0
      %483 = vmatprep.subr.mxu0 0.0
      %484 = vmatpush2.msra.mxu0 0.0
      %485 = vmatprep.subr.mxu0 0.0
      %486 = vmatpush2.msra.mxu0 0.0
      %487 = vmatprep.subr.mxu0 0.0
      %488 = vmatpush2.msra.mxu0 0.0
      %489 = vmatprep.subr.mxu0 0.0
      %490 = vmatpush2.msra.mxu0 0.0
      %491 = vmatprep.subr.mxu0 0.0
      %492 = vmatpush2.msra.mxu0 0.0
      %493 = vmatprep.subr.mxu0 0.0
      %494 = vmatpush2.msra.mxu0 0.0
      %495 = vmatprep.subr.mxu0 0.0
      %496 = vmatpush2.msra.mxu0 0.0
      %497 = vmatprep.subr.mxu0 0.0
      %498 = vmatpush2.msra.mxu0 0.0
      %499 = vmatprep.subr.mxu0 0.0
      %500 = vmatpush2.msra.mxu0 0.0
      %501 = vmatprep.subr.mxu0 0.0
      %502 = vmatpush2.msra.mxu0 0.0
      %503 = vmatprep.subr.mxu0 0.0
      %504 = vmatpush2.msra.mxu0 0.0
      %505 = vmatprep.subr.mxu0 0.0
      %506 = vmatpush2.msra.mxu0 0.0
      %507 = vmatprep.subr.mxu0 0.0
      %508 = vmatpush2.msra.mxu0 0.0
      %509 = vmatprep.mubr.f32.mxu0 0.0
      %510 = vmatmul.mubr.f32.gmra.mxu0 %v354
      %v511 = vpop.f32.mrf.mxu0
      %v512 = vadd.f32 0.0, %v511
      %v513 = vpop.f32.mrf.mxu0
      %514 = vmatprep.mubr.f32.mxu0 0.0
      %515 = vmatmul.mubr.f32.gmra.mxu0 %v357
      %v516 = vpop.f32.mrf.mxu0
      %v517 = vadd.f32 0.0, %v516
      %v518 = vpop.f32.mrf.mxu0
      %519 = vdwg.mxu0
      %520 = vst.msk [vmem:[%s280] sm:$0xff] %vm438, %v512
      %521 = vst.msk [vmem:[%s280 + $0x8] sm:$0xff] %vm438, %v517
      %v522 = vpack.c.bf16 %v348, %v345
      %v524 = vunpack.c.l.b16 %v522
      %v525 = vunpack.c.h.b16 %v522
      %v526 = vpack.c.b16 %v524, %v524
      %v527 = vpack.c.b16 %v525, %v525
      %vm530 = vcmask 27648
      %531 = vst.msk [vmem:[%s268] sm:$0xf] %vm530, %v526
      %532 = vst.msk [vmem:[%s268 + $0x4] sm:$0xf] %vm530, %v527
      %s533 = smul.u32 2, %s18
      %p534 = scmp.lt.s32.totalorder %s533, 3
      %s535 = scalar_select %p534, %s533, 3
      %s536 = smul.addr %s535, 4
      %s537 = scalar_lea.vmem %s4, %s536
      %s538 = smul.u32 2, %s18
      %p539 = scmp.lt.s32.totalorder %s538, 3
      %s540 = scalar_select %p539, %s538, 3
      %s541 = smul.addr %s540, 8
      %s542 = scalar_lea.vmem %s5, %s541
      %s543 = smul.u32 2, %s18
      %p544 = scmp.lt.s32.totalorder %s543, 3
      %s545 = scalar_select %p544, %s543, 3
      %s546 = smul.addr %s545, 8
      %s547 = scalar_lea.vmem %s6, %s546
      // Predicated region
      $region37: #{gatnet_forward.6} parent=35 // pred_check
        %p548 = pneg %p125
      $region38: #{gatnet_forward.6} parent=35 // pred_check_branch
        %550 = sbr.rel (%p548) target = $region40
      $region39: #{gatnet_forward.6} parent=35 // pred_region
        %s551 = smul.u32 2, %s18
      $region40: #{gatnet_forward.6} parent=35 // pred_fallthru
        _
      // Predicated region
      $region41: #{gatnet_forward.6} parent=35 // pred_check
        %p552 = pneg %p151
      $region42: #{gatnet_forward.6} parent=35 // pred_check_branch
        %554 = sbr.rel (%p552) target = $region44
      $region43: #{gatnet_forward.6} parent=35 // pred_region
        %s555 = smul.u32 2, %s18
      $region44: #{gatnet_forward.6} parent=35 // pred_fallthru
        _
      // Predicated region
      $region45: #{gatnet_forward.6} parent=35 // pred_check
        %p556 = pneg %p177
      $region46: #{gatnet_forward.6} parent=35 // pred_check_branch
        %558 = sbr.rel (%p556) target = $region48
      $region47: #{gatnet_forward.6} parent=35 // pred_region
        %s559 = smul.u32 2, %s18
      $region48: #{gatnet_forward.6} parent=35 // pred_fallthru
        _
    $region36: #{gatnet_forward.6} parent=5 // pred_fallthru
      _
    %p560 = scmp.le.s32.totalorder 2, %s13
    // Predicated region
    $region49: #{gatnet_forward.6} parent=5 // pred_check
      %p561 = pneg %p560
    $region50: #{gatnet_forward.6} parent=5 // pred_check_branch
      %563 = sbr.rel (%p561) target = $region52
    $region51: #{gatnet_forward.6} parent=5 // pred_region
      %s564 = ssub.s32 %s13, 2
      // Predicated region
      $region53: #{gatnet_forward.6} parent=51 // pred_check
        %p565 = pneg %p131
      $region54: #{gatnet_forward.6} parent=51 // pred_check_branch
        %567 = sbr.rel (%p565) target = $region56
      $region55: #{gatnet_forward.6} parent=51 // pred_region
        %s568 = smul.u32 2, %s19
        %p569 = scmp.lt.s32.totalorder %s568, 3
        %s570 = scalar_select %p569, %s568, 3
        %s571 = smul.addr %s570, 4
        %s572 = scalar_lea.vmem %s4, %s571
      $region56: #{gatnet_forward.6} parent=51 // pred_fallthru
        _
      // Predicated region
      $region57: #{gatnet_forward.6} parent=51 // pred_check
        %p573 = pneg %p157
      $region58: #{gatnet_forward.6} parent=51 // pred_check_branch
        %575 = sbr.rel (%p573) target = $region60
      $region59: #{gatnet_forward.6} parent=51 // pred_region
        %s576 = smul.u32 2, %s19
        %p577 = scmp.lt.s32.totalorder %s576, 3
        %s578 = scalar_select %p577, %s576, 3
        %s579 = smul.addr %s578, 8
        %s580 = scalar_lea.vmem %s5, %s579
      $region60: #{gatnet_forward.6} parent=51 // pred_fallthru
        _
      // Predicated region
      $region61: #{gatnet_forward.6} parent=51 // pred_check
        %p581 = pneg %p183
      $region62: #{gatnet_forward.6} parent=51 // pred_check_branch
        %583 = sbr.rel (%p581) target = $region64
      $region63: #{gatnet_forward.6} parent=51 // pred_region
        %s584 = smul.u32 2, %s19
        %p585 = scmp.lt.s32.totalorder %s584, 3
        %s586 = scalar_select %p585, %s584, 3
        %s587 = smul.addr %s586, 8
        %s588 = scalar_lea.vmem %s6, %s587
      $region64: #{gatnet_forward.6} parent=51 // pred_fallthru
        _
    $region52: #{gatnet_forward.6} parent=5 // pred_fallthru
      _
  $region6: #{gatnet_forward.6} parent=0 // loop_footer
    %s17 = sadd.s32 1, %s13
  $region7: #{gatnet_forward.6} parent=0 // loop_footer_branch
    %12 = sbr.rel target = $region3
  $region8: #{gatnet_forward.6} parent=0 // loop_exit
    _

// kernel: gatnet_forward.5
$region0: #{gatnet_forward.5}
  #allocation0 [shape = 'u32[]', space=smem, size = 0x4, offset = 0x4, fixed_abs, tag = 'smem constant byte address 0x4 - core index']
  #allocation1 [shape = 'u32[144,128]{1,0:T(1,128)}', space=vmem, size = 0x12000, scoped, tag = 'internal scratch']
  %s0 = inlined_call_operand.vmem [shape: bf16[32,32], index: 0, kind: input, shape index: {}]
  %s1 = inlined_call_operand.vmem [shape: bf16[32,16], index: 1, kind: input, shape index: {}]
  %s2 = inlined_call_operand.vmem [shape: f32[2,32], index: 2, kind: input, shape index: {}]
  %s3 = inlined_call_operand.vmem [shape: f32[32,2], index: 3, kind: input, shape index: {}]
  %s4 = inlined_call_operand.vmem [shape: f32[1,16], index: 4, kind: input, shape index: {}]
  %s5 = inlined_call_operand.vmem [shape: bf16[32,16], index: 5, kind: output, shape index: {}]
  %s6 = sld [smem:[#allocation0]]
  $region53: #{gatnet_forward.5} parent=0
    _
  %s8 = ssub.s32 1, %s6
  %s9 = scalar_select 0, %s8, %s6
  loop: start=0, step=1, limit=4
  $region2: #{gatnet_forward.5} parent=0 // loop_pre_header
    _
  $region3: #{gatnet_forward.5} parent=0 // loop_header
    %s11 = sphi 0, %s15
    %p12 = scmp.ge.s32.totalorder %s11, 4
    %s21 = sphi 0, %s23
    %s24 = sphi 0, %s21
    %s25 = sphi 0, %s24
    %s41 = sphi 0, %s25
    %s45 = sphi 0, %s45
    %s47 = sphi 0, %s45
    %s48 = sphi 0, %s47
    %s62 = sphi 0, %s48
    %s66 = sphi 0, %s66
    %s68 = sphi 0, %s66
    %s69 = sphi 0, %s68
    %s83 = sphi 0, %s69
    %s89 = sphi 0, %s91
    %s92 = sphi 0, %s89
    %s93 = sphi 0, %s92
    %s109 = sphi 0, %s93
    %s113 = sphi 0, %s113
    %s115 = sphi 0, %s113
    %s116 = sphi 0, %s115
    %s130 = sphi 0, %s116
    %s136 = sphi 0, %s138
    %s139 = sphi 0, %s136
    %s140 = sphi 0, %s139
    %s156 = sphi 0, %s140
  $region4: #{gatnet_forward.5} parent=0 // loop_header_branch
    %14 = sbr.rel (%p12) target = $region8
  $region5: #{gatnet_forward.5} parent=0 // loop_body
    %s16 = ssub.s32 %s11, 1
    %s17 = ssub.s32 %s11, 2
    %s18 = sadd.s32 %s11, 1
    %s19 = ssub.s32 %s11, %s18
    %p20 = scmp.eq.s32.totalorder %s19, 0
    %s22 = sadd.s32 %s21, 1
    %s23 = scalar_select %p20, %s21, %s22
    %p26 = pneg %p20
    %p27 = scmp.eq.s32.totalorder %s11, 1
    %p28 = por %p26, %p27
    %p29 = scmp.ne.s32.totalorder %s21, %s24
    %p30 = scmp.eq.s32.totalorder %s11, 0
    %p31 = por %p29, %p30
    %p32 = scmp.ne.s32.totalorder %s21, %s24
    %p33 = scmp.eq.s32.totalorder %s16, 1
    %p34 = por %p32, %p33
    %p35 = scmp.ne.s32.totalorder %s24, %s25
    %p36 = scmp.eq.s32.totalorder %s16, 0
    %p37 = por %p35, %p36
    %p38 = scmp.ne.s32.totalorder %s24, %s25
    %p39 = scmp.eq.s32.totalorder %s17, 1
    %p40 = por %p38, %p39
    %p42 = scmp.ne.s32.totalorder %s25, %s41
    %p43 = scmp.eq.s32.totalorder %s17, 0
    %p44 = por %p42, %p43
    %s46 = sadd.s32 %s45, 1
    %p49 = scmp.eq.s32.totalorder %s11, 1
    %p50 = scmp.ne.s32.totalorder %s45, %s47
    %p51 = scmp.eq.s32.totalorder %s11, 0
    %p52 = por %p50, %p51
    %p53 = scmp.ne.s32.totalorder %s45, %s47
    %p54 = scmp.eq.s32.totalorder %s16, 1
    %p55 = por %p53, %p54
    %p56 = scmp.ne.s32.totalorder %s47, %s48
    %p57 = scmp.eq.s32.totalorder %s16, 0
    %p58 = por %p56, %p57
    %p59 = scmp.ne.s32.totalorder %s47, %s48
    %p60 = scmp.eq.s32.totalorder %s17, 1
    %p61 = por %p59, %p60
    %p63 = scmp.ne.s32.totalorder %s48, %s62
    %p64 = scmp.eq.s32.totalorder %s17, 0
    %p65 = por %p63, %p64
    %s67 = sadd.s32 %s66, 1
    %p70 = scmp.eq.s32.totalorder %s11, 1
    %p71 = scmp.ne.s32.totalorder %s66, %s68
    %p72 = scmp.eq.s32.totalorder %s11, 0
    %p73 = por %p71, %p72
    %p74 = scmp.ne.s32.totalorder %s66, %s68
    %p75 = scmp.eq.s32.totalorder %s16, 1
    %p76 = por %p74, %p75
    %p77 = scmp.ne.s32.totalorder %s68, %s69
    %p78 = scmp.eq.s32.totalorder %s16, 0
    %p79 = por %p77, %p78
    %p80 = scmp.ne.s32.totalorder %s68, %s69
    %p81 = scmp.eq.s32.totalorder %s17, 1
    %p82 = por %p80, %p81
    %p84 = scmp.ne.s32.totalorder %s69, %s83
    %p85 = scmp.eq.s32.totalorder %s17, 0
    %p86 = por %p84, %p85
    %s87 = ssub.s32 %s11, %s18
    %p88 = scmp.eq.s32.totalorder %s87, 0
    %s90 = sadd.s32 %s89, 1
    %s91 = scalar_select %p88, %s89, %s90
    %p94 = pneg %p88
    %p95 = scmp.eq.s32.totalorder %s11, 1
    %p96 = por %p94, %p95
    %p97 = scmp.ne.s32.totalorder %s89, %s92
    %p98 = scmp.eq.s32.totalorder %s11, 0
    %p99 = por %p97, %p98
    %p100 = scmp.ne.s32.totalorder %s89, %s92
    %p101 = scmp.eq.s32.totalorder %s16, 1
    %p102 = por %p100, %p101
    %p103 = scmp.ne.s32.totalorder %s92, %s93
    %p104 = scmp.eq.s32.totalorder %s16, 0
    %p105 = por %p103, %p104
    %p106 = scmp.ne.s32.totalorder %s92, %s93
    %p107 = scmp.eq.s32.totalorder %s17, 1
    %p108 = por %p106, %p107
    %p110 = scmp.ne.s32.totalorder %s93, %s109
    %p111 = scmp.eq.s32.totalorder %s17, 0
    %p112 = por %p110, %p111
    %s114 = sadd.s32 %s113, 1
    %p117 = scmp.eq.s32.totalorder %s11, 1
    %p118 = scmp.ne.s32.totalorder %s113, %s115
    %p119 = scmp.eq.s32.totalorder %s11, 0
    %p120 = por %p118, %p119
    %p121 = scmp.ne.s32.totalorder %s113, %s115
    %p122 = scmp.eq.s32.totalorder %s16, 1
    %p123 = por %p121, %p122
    %p124 = scmp.ne.s32.totalorder %s115, %s116
    %p125 = scmp.eq.s32.totalorder %s16, 0
    %p126 = por %p124, %p125
    %p127 = scmp.ne.s32.totalorder %s115, %s116
    %p128 = scmp.eq.s32.totalorder %s17, 1
    %p129 = por %p127, %p128
    %p131 = scmp.ne.s32.totalorder %s116, %s130
    %p132 = scmp.eq.s32.totalorder %s17, 0
    %p133 = por %p131, %p132
    %s134 = ssub.s32 %s11, %s18
    %p135 = scmp.eq.s32.totalorder %s134, 0
    %s137 = sadd.s32 %s136, 1
    %s138 = scalar_select %p135, %s136, %s137
    %p141 = pneg %p135
    %p142 = scmp.eq.s32.totalorder %s11, 1
    %p143 = por %p141, %p142
    %p144 = scmp.ne.s32.totalorder %s136, %s139
    %p145 = scmp.eq.s32.totalorder %s11, 0
    %p146 = por %p144, %p145
    %p147 = scmp.ne.s32.totalorder %s136, %s139
    %p148 = scmp.eq.s32.totalorder %s16, 1
    %p149 = por %p147, %p148
    %p150 = scmp.ne.s32.totalorder %s139, %s140
    %p151 = scmp.eq.s32.totalorder %s16, 0
    %p152 = por %p150, %p151
    %p153 = scmp.ne.s32.totalorder %s139, %s140
    %p154 = scmp.eq.s32.totalorder %s17, 1
    %p155 = por %p153, %p154
    %p157 = scmp.ne.s32.totalorder %s140, %s156
    %p158 = scmp.eq.s32.totalorder %s17, 0
    %p159 = por %p157, %p158
    %p160 = scmp.le.s32.totalorder 1, %s11
    %p161 = scmp.lt.s32.totalorder %s11, 3
    %p162 = pnand %p160, %p161
    %p163 = pneg %p162
    // Predicated region
    $region9: #{gatnet_forward.5} parent=5 // pred_check
      _
    $region10: #{gatnet_forward.5} parent=5 // pred_check_branch
      %165 = sbr.rel (%p162) target = $region12
    $region11: #{gatnet_forward.5} parent=5 // pred_region
      %s166 = ssub.s32 %s11, 1
      // Predicated region
      $region13: #{gatnet_forward.5} parent=11 // pred_check
        %p167 = pneg %p58
      $region14: #{gatnet_forward.5} parent=11 // pred_check_branch
        %169 = sbr.rel (%p167) target = $region16
      $region15: #{gatnet_forward.5} parent=11 // pred_region
        _
      $region16: #{gatnet_forward.5} parent=11 // pred_fallthru
        _
      // Predicated region
      $region17: #{gatnet_forward.5} parent=11 // pred_check
        %p170 = pneg %p79
      $region18: #{gatnet_forward.5} parent=11 // pred_check_branch
        %172 = sbr.rel (%p170) target = $region20
      $region19: #{gatnet_forward.5} parent=11 // pred_region
        _
      $region20: #{gatnet_forward.5} parent=11 // pred_fallthru
        _
      // Predicated region
      $region21: #{gatnet_forward.5} parent=11 // pred_check
        %p173 = pneg %p126
      $region22: #{gatnet_forward.5} parent=11 // pred_check_branch
        %175 = sbr.rel (%p173) target = $region24
      $region23: #{gatnet_forward.5} parent=11 // pred_region
        _
      $region24: #{gatnet_forward.5} parent=11 // pred_fallthru
        _
    $region12: #{gatnet_forward.5} parent=5 // pred_fallthru
      _
    %p176 = scmp.lt.s32.totalorder %s11, 2
    // Predicated region
    $region25: #{gatnet_forward.5} parent=5 // pred_check
      %p177 = pneg %p176
    $region26: #{gatnet_forward.5} parent=5 // pred_check_branch
      %179 = sbr.rel (%p177) target = $region28
    $region27: #{gatnet_forward.5} parent=5 // pred_region
      // Predicated region
      $region29: #{gatnet_forward.5} parent=27 // pred_check
        %p180 = pneg %p31
      $region30: #{gatnet_forward.5} parent=27 // pred_check_branch
        %182 = sbr.rel (%p180) target = $region32
      $region31: #{gatnet_forward.5} parent=27 // pred_region
        %s183 = smul.u32 2, %s11
        %p184 = scmp.lt.s32.totalorder %s183, 3
        %s185 = scalar_select %p184, %s183, 3
        %s186 = smul.addr %s185, 4
        %s187 = scalar_lea.vmem %s0, %s186
        %s188 = smul.u32 2, %s11
      $region32: #{gatnet_forward.5} parent=27 // pred_fallthru
        _
      // Predicated region
      $region33: #{gatnet_forward.5} parent=27 // pred_check
        %p189 = pneg %p99
      $region34: #{gatnet_forward.5} parent=27 // pred_check_branch
        %191 = sbr.rel (%p189) target = $region36
      $region35: #{gatnet_forward.5} parent=27 // pred_region
        %s192 = smul.u32 2, %s11
        %p193 = scmp.lt.s32.totalorder %s192, 3
        %s194 = scalar_select %p193, %s192, 3
        %s195 = smul.addr %s194, 8
        %s196 = scalar_lea.vmem %s3, %s195
        %s197 = smul.u32 2, %s11
      $region36: #{gatnet_forward.5} parent=27 // pred_fallthru
        _
    $region28: #{gatnet_forward.5} parent=5 // pred_fallthru
      _
    %p198 = scmp.le.s32.totalorder 1, %s11
    %p199 = scmp.lt.s32.totalorder %s11, 3
    %p200 = pnand %p198, %p199
    %p201 = pneg %p200
    // Predicated region
    $region37: #{gatnet_forward.5} parent=5 // pred_check
      _
    $region38: #{gatnet_forward.5} parent=5 // pred_check_branch
      %203 = sbr.rel (%p200) target = $region40
    $region39: #{gatnet_forward.5} parent=5 // pred_region
      %s204 = ssub.s32 %s11, 1
      %s205 = smul.u32 2, %s16
      %p206 = scmp.lt.s32.totalorder %s205, 3
      %s207 = scalar_select %p206, %s205, 3
      %s208 = smul.addr %s207, 4
      %s209 = scalar_lea.vmem %s0, %s208
      %p210 = pneg %p37
      %p211 = pneg %p34
      %p212 = pneg %p58
      %p213 = pneg %p55
      %p214 = pneg %p79
      %p215 = pneg %p76
      %s216 = smul.u32 2, %s16
      %p217 = scmp.lt.s32.totalorder %s216, 3
      %s218 = scalar_select %p217, %s216, 3
      %s219 = smul.addr %s218, 8
      %s220 = scalar_lea.vmem %s3, %s219
      %p221 = pneg %p105
      %p222 = pneg %p102
      %p223 = pneg %p126
      %p224 = pneg %p123
      %p225 = pneg %p152
      %p226 = pneg %p149
      %s227 = smul.u32 2, %s16
      %p228 = scmp.lt.s32.totalorder %s227, 3
      %s229 = scalar_select %p228, %s227, 3
      %s230 = smul.addr %s229, 4
      %s231 = scalar_lea.vmem %s5, %s230
      %s232 = smul.u32 2, %s16
      %p233 = scmp.lt.s32.totalorder %s232, 3
      %s234 = scalar_select %p233, %s232, 3
      %s235 = smul.addr %s234, 4
      %s236 = scalar_lea.vmem %s0, %s235
      %s237 = smul.u32 2, %s16
      %s238 = smul.u32 2, %s16
      %p239 = scmp.lt.s32.totalorder %s238, 3
      %s240 = scalar_select %p239, %s238, 3
      %s241 = smul.addr %s240, 8
      %s242 = scalar_lea.vmem %s3, %s241
      %s243 = smul.u32 2, %s16
      %s244 = smul.u32 2, %s16
      %p245 = scmp.lt.s32.totalorder %s244, 3
      %s246 = scalar_select %p245, %s244, 3
      %s247 = smul.addr %s246, 4
      %s248 = scalar_lea.vmem %s5, %s247
      %s249 = smul.u32 2, %s16
      %v253 = vld [vmem:[%s236] sm:$0xf]
      %v254 = vld [vmem:[%s236 + $0x4] sm:$0xf]
      %vm255 = vcmp.gt.bf16.partialorder %v253, 0
      %vm256 = vcmp.gt.bf16.partialorder %v254, 0
      %v257 = vld [vmem:[%s1] sm:$0xf]
      %v258 = vld [vmem:[%s1 + $0x4] sm:$0xf]
      %v259 = vld [vmem:[%s1 + $0x8] sm:$0xf]
      %v260 = vld [vmem:[%s1 + $0xc] sm:$0xf]
      %v261 = vld [vmem:[%s2] sm:$0x3]
      %v262 = vld [vmem:[%s242] sm:$0xff]
      %v263 = vld [vmem:[%s242 + $0x8] sm:$0xff]
      %265 = vset.pattern.permute.xlu0 0
      %266 = vperm.xlu0 %265, %v262
      %v267 = vpop.permute.xlu0 %266
      %270 = vset.pattern.permute.xlu0 0
      %271 = vperm.xlu0 %270, %v263
      %v272 = vpop.permute.xlu0 %271
      %v274 = vlaneseq
      %v275 = vshrl.u32 %v274, 7
      %v276 = vsub.s32 0, %v275
      %v277 = vrot.slane %v261, %v276
      %v278 = vadd.f32 %v267, %v277
      %v279 = vadd.f32 %v272, %v277
      %vm280 = vcmp.gt.f32.partialorder %v278, 0.0
      %vm281 = vcmp.gt.f32.partialorder %v279, 0.0
      %v282 = vmul.f32 %v278, 0.2
      %v283 = vmul.f32 %v279, 0.2
      %v284 = vsel %vm280, %v278, %v282
      %v285 = vsel %vm281, %v279, %v283
      %v286 = vsel %vm255, 65537, 0
      %v287 = vsel %vm256, 65537, 0
      %v288 = vunpack.c.l.b16 %v286
      %v289 = vunpack.c.l.b16 %v287
      %vm290 = vcmp.ne.s32.totalorder %v288, 0
      %vm291 = vcmp.ne.s32.totalorder %v289, 0
      %v292 = vsel %vm290, %v284, -1e+30
      %v293 = vsel %vm291, %v285, -1e+30
      %vm294 = vcmask 261120
      %v295 = vsel %vm294, %v292, -inf
      %296 = vmax.xlane.f32.xlu0 %v295
      %v297 = vpop.xlane.xlu0 %296
      %v298 = vsel %vm294, %v293, -inf
      %299 = vmax.xlane.f32.xlu0 %v298
      %v300 = vpop.xlane.xlu0 %299
      %v301 = vsub.f32 %v292, %v297
      %v302 = vsub.f32 %v293, %v300
      %v303 = vmul.f32 %v301, 1.442695
      %v304 = vpow.pop %v303
      %v305 = vmul.f32 %v302, 1.442695
      %v306 = vpow.pop %v305
      %v307 = vsel %vm290, %v304, 0.0
      %v308 = vsel %vm291, %v306, 0.0
      %v309 = vsel %vm294, %v307, 0.0
      %310 = vadd.xlane.f32.xlu0 %v309
      %v311 = vpop.xlane.xlu0 %310
      %v312 = vsel %vm294, %v308, 0.0
      %313 = vadd.xlane.f32.xlu0 %v312
      %v314 = vpop.xlane.xlu0 %313
      %v315 = vmax.f32 %v311, 1e-09
      %v316 = vmax.f32 %v314, 1e-09
      %v317 = vrcp.pop %v315
      %v318 = vrcp.pop %v316
      %v319 = vmul.f32 %v307, %v317
      %v320 = vmul.f32 %v308, %v318
      %v321 = vpack.c.bf16 %v320, %v319
      %v326 = vunpack.c.l.b16 %v257
      %v327 = vunpack.c.l.b16 %v258
      %v328 = vunpack.c.l.b16 %v259
      %v329 = vunpack.c.l.b16 %v260
      %v330 = vpack.c.b16 %v327, %v326
      %v331 = vpack.c.b16 %v329, %v328
      %v335 = vsel %vm294, %v321, 0
      %337 = vmatprep.subr.bf16.mxu0 0
      %338 = vmatpush1.bf16.msra.mxu0 0
      %339 = vmatprep.subr.bf16.mxu0 0
      %340 = vmatpush1.bf16.msra.mxu0 0
      %341 = vmatprep.subr.bf16.mxu0 0
      %342 = vmatpush1.bf16.msra.mxu0 0
      %343 = vmatprep.subr.bf16.mxu0 0
      %344 = vmatpush1.bf16.msra.mxu0 0
      %345 = vmatprep.subr.bf16.mxu0 0
      %346 = vmatpush1.bf16.msra.mxu0 0
      %347 = vmatprep.subr.bf16.mxu0 0
      %348 = vmatpush1.bf16.msra.mxu0 0
      %349 = vmatprep.subr.bf16.mxu0 0
      %350 = vmatpush1.bf16.msra.mxu0 %v331
      %351 = vmatprep.subr.bf16.mxu0 0
      %352 = vmatpush1.bf16.msra.mxu0 %v330
      %353 = vmatprep.subr.bf16.mxu0 0
      %354 = vmatpush2.bf16.msra.mxu0 0
      %355 = vmatprep.subr.bf16.mxu0 0
      %356 = vmatpush2.bf16.msra.mxu0 0
      %357 = vmatprep.subr.bf16.mxu0 0
      %358 = vmatpush2.bf16.msra.mxu0 0
      %359 = vmatprep.subr.bf16.mxu0 0
      %360 = vmatpush2.bf16.msra.mxu0 0
      %361 = vmatprep.subr.bf16.mxu0 0
      %362 = vmatpush2.bf16.msra.mxu0 0
      %363 = vmatprep.subr.bf16.mxu0 0
      %364 = vmatpush2.bf16.msra.mxu0 0
      %365 = vmatprep.subr.bf16.mxu0 0
      %366 = vmatpush2.bf16.msra.mxu0 0
      %367 = vmatprep.subr.bf16.mxu0 0
      %368 = vmatpush2.bf16.msra.mxu0 0
      %369 = vmatprep.mubr.bf16.mxu0 0
      %370 = vmatmul.mubr.bf16.gmra.mxu0 %v335
      %v371 = vpop.f32.mrf.mxu0
      %v372 = vadd.f32 0.0, %v371
      %v373 = vpop.f32.mrf.mxu0
      %v374 = vpop.f32.mrf.mxu0
      %v375 = vadd.f32 0.0, %v374
      %v376 = vpop.f32.mrf.mxu0
      %377 = vdwg.mxu0
      %378 = vset.pattern.permute.xlu0 1
      %379 = vperm.xlu0 %378, %v262
      %v380 = vpop.permute.xlu0 %379
      %382 = vset.pattern.permute.xlu0 1
      %383 = vperm.xlu0 %382, %v263
      %v384 = vpop.permute.xlu0 %383
      %v386 = vlaneseq
      %v387 = vshrl.u32 %v386, 7
      %v388 = vsub.s32 1, %v387
      %v389 = vrot.slane %v261, %v388
      %v390 = vadd.f32 %v380, %v389
      %v391 = vadd.f32 %v384, %v389
      %vm392 = vcmp.gt.f32.partialorder %v390, 0.0
      %vm393 = vcmp.gt.f32.partialorder %v391, 0.0
      %v394 = vmul.f32 %v390, 0.2
      %v395 = vmul.f32 %v391, 0.2
      %v396 = vsel %vm392, %v390, %v394
      %v397 = vsel %vm393, %v391, %v395
      %v398 = vsel %vm290, %v396, -1e+30
      %v399 = vsel %vm291, %v397, -1e+30
      %v400 = vsel %vm294, %v398, -inf
      %401 = vmax.xlane.f32.xlu0 %v400
      %v402 = vpop.xlane.xlu0 %401
      %v403 = vsel %vm294, %v399, -inf
      %404 = vmax.xlane.f32.xlu0 %v403
      %v405 = vpop.xlane.xlu0 %404
      %v406 = vsub.f32 %v398, %v402
      %v407 = vsub.f32 %v399, %v405
      %v408 = vmul.f32 %v406, 1.442695
      %v409 = vpow.pop %v408
      %v410 = vmul.f32 %v407, 1.442695
      %v411 = vpow.pop %v410
      %v412 = vsel %vm290, %v409, 0.0
      %v413 = vsel %vm291, %v411, 0.0
      %v414 = vsel %vm294, %v412, 0.0
      %415 = vadd.xlane.f32.xlu0 %v414
      %v416 = vpop.xlane.xlu0 %415
      %v417 = vsel %vm294, %v413, 0.0
      %418 = vadd.xlane.f32.xlu0 %v417
      %v419 = vpop.xlane.xlu0 %418
      %v420 = vmax.f32 %v416, 1e-09
      %v421 = vmax.f32 %v419, 1e-09
      %v422 = vrcp.pop %v420
      %v423 = vrcp.pop %v421
      %v424 = vmul.f32 %v412, %v422
      %v425 = vmul.f32 %v413, %v423
      %v426 = vpack.c.bf16 %v425, %v424
      %427 = vrot.lane.b32.xlu0 %v330, 120
      %v428 = vpop.permute.xlu0 %427
      %429 = vrot.lane.b32.xlu0 %v331, 120
      %v430 = vpop.permute.xlu0 %429
      %v434 = vsel %vm294, %v426, 0
      %436 = vmatprep.subr.bf16.mxu0 0
      %437 = vmatpush1.bf16.msra.mxu0 0
      %438 = vmatprep.subr.bf16.mxu0 0
      %439 = vmatpush1.bf16.msra.mxu0 0
      %440 = vmatprep.subr.bf16.mxu0 0
      %441 = vmatpush1.bf16.msra.mxu0 0
      %442 = vmatprep.subr.bf16.mxu0 0
      %443 = vmatpush1.bf16.msra.mxu0 0
      %444 = vmatprep.subr.bf16.mxu0 0
      %445 = vmatpush1.bf16.msra.mxu0 0
      %446 = vmatprep.subr.bf16.mxu0 0
      %447 = vmatpush1.bf16.msra.mxu0 0
      %448 = vmatprep.subr.bf16.mxu0 0
      %449 = vmatpush1.bf16.msra.mxu0 %v430
      %450 = vmatprep.subr.bf16.mxu0 0
      %451 = vmatpush1.bf16.msra.mxu0 %v428
      %452 = vmatprep.subr.bf16.mxu0 0
      %453 = vmatpush2.bf16.msra.mxu0 0
      %454 = vmatprep.subr.bf16.mxu0 0
      %455 = vmatpush2.bf16.msra.mxu0 0
      %456 = vmatprep.subr.bf16.mxu0 0
      %457 = vmatpush2.bf16.msra.mxu0 0
      %458 = vmatprep.subr.bf16.mxu0 0
      %459 = vmatpush2.bf16.msra.mxu0 0
      %460 = vmatprep.subr.bf16.mxu0 0
      %461 = vmatpush2.bf16.msra.mxu0 0
      %462 = vmatprep.subr.bf16.mxu0 0
      %463 = vmatpush2.bf16.msra.mxu0 0
      %464 = vmatprep.subr.bf16.mxu0 0
      %465 = vmatpush2.bf16.msra.mxu0 0
      %466 = vmatprep.subr.bf16.mxu0 0
      %467 = vmatpush2.bf16.msra.mxu0 0
      %468 = vmatprep.mubr.bf16.mxu0 0
      %469 = vmatmul.mubr.bf16.gmra.mxu0 %v434
      %v470 = vpop.f32.mrf.mxu0
      %v471 = vadd.f32 0.0, %v470
      %v472 = vpop.f32.mrf.mxu0
      %v473 = vpop.f32.mrf.mxu0
      %v474 = vadd.f32 0.0, %v473
      %v475 = vpop.f32.mrf.mxu0
      %476 = vdwg.mxu0
      %479 = vrot.lane.b32.xlu0 %v471, 8
      %v480 = vpop.permute.xlu0 %479
      %481 = vrot.lane.b32.xlu0 %v474, 8
      %v482 = vpop.permute.xlu0 %481
      %vm485 = vcmask 64512
      %v486 = vsel %vm485, %v372, %v480
      %v487 = vsel %vm485, %v375, %v482
      %v488 = vld [vmem:[%s4] sm:$0x1]
      %v490 = vlaneseq
      %v491 = vshrl.u32 %v490, 7
      %v492 = vsub.s32 0, %v491
      %v493 = vrot.slane %v488, %v492
      %v495 = vadd.f32 %v486, %v493
      %v496 = vadd.f32 %v487, %v493
      %v497 = vpack.c.bf16 %v496, %v495
      %v499 = vunpack.c.l.b16 %v497
      %v500 = vunpack.c.h.b16 %v497
      %v501 = vpack.c.b16 %v499, %v499
      %v502 = vpack.c.b16 %v500, %v500
      %vm505 = vcmask 125952
      %506 = vst.msk [vmem:[%s248] sm:$0xf] %vm505, %v501
      %507 = vst.msk [vmem:[%s248 + $0x4] sm:$0xf] %vm505, %v502
      %s508 = smul.u32 2, %s16
      %p509 = scmp.lt.s32.totalorder %s508, 3
      %s510 = scalar_select %p509, %s508, 3
      %s511 = smul.addr %s510, 4
      %s512 = scalar_lea.vmem %s5, %s511
      // Predicated region
      $region41: #{gatnet_forward.5} parent=39 // pred_check
        %p513 = pneg %p149
      $region42: #{gatnet_forward.5} parent=39 // pred_check_branch
        %515 = sbr.rel (%p513) target = $region44
      $region43: #{gatnet_forward.5} parent=39 // pred_region
        %s516 = smul.u32 2, %s16
      $region44: #{gatnet_forward.5} parent=39 // pred_fallthru
        _
    $region40: #{gatnet_forward.5} parent=5 // pred_fallthru
      _
    %p517 = scmp.le.s32.totalorder 2, %s11
    // Predicated region
    $region45: #{gatnet_forward.5} parent=5 // pred_check
      %p518 = pneg %p517
    $region46: #{gatnet_forward.5} parent=5 // pred_check_branch
      %520 = sbr.rel (%p518) target = $region48
    $region47: #{gatnet_forward.5} parent=5 // pred_region
      %s521 = ssub.s32 %s11, 2
      // Predicated region
      $region49: #{gatnet_forward.5} parent=47 // pred_check
        %p522 = pneg %p155
      $region50: #{gatnet_forward.5} parent=47 // pred_check_branch
        %524 = sbr.rel (%p522) target = $region52
      $region51: #{gatnet_forward.5} parent=47 // pred_region
        %s525 = smul.u32 2, %s17
        %p526 = scmp.lt.s32.totalorder %s525, 3
        %s527 = scalar_select %p526, %s525, 3
        %s528 = smul.addr %s527, 4
        %s529 = scalar_lea.vmem %s5, %s528
      $region52: #{gatnet_forward.5} parent=47 // pred_fallthru
        _
    $region48: #{gatnet_forward.5} parent=5 // pred_fallthru
      _
  $region6: #{gatnet_forward.5} parent=0 // loop_footer
    %s15 = sadd.s32 1, %s11
  $region7: #{gatnet_forward.5} parent=0 // loop_footer_branch
    %10 = sbr.rel target = $region3
  $region8: #{gatnet_forward.5} parent=0 // loop_exit
    _

// kernel: gatnet_forward.7
$region0: #{gatnet_forward.7}
  #allocation0 [shape = 'u32[]', space=smem, size = 0x4, offset = 0x4, fixed_abs, tag = 'smem constant byte address 0x4 - core index']
  #allocation1 [shape = 'u32[144,128]{1,0:T(1,128)}', space=vmem, size = 0x12000, scoped, tag = 'internal scratch']
  %s0 = inlined_call_operand.vmem [shape: bf16[32,32], index: 0, kind: input, shape index: {}]
  %s1 = inlined_call_operand.vmem [shape: bf16[32,4], index: 1, kind: input, shape index: {}]
  %s2 = inlined_call_operand.vmem [shape: f32[1,32], index: 2, kind: input, shape index: {}]
  %s3 = inlined_call_operand.vmem [shape: f32[32,1], index: 3, kind: input, shape index: {}]
  %s4 = inlined_call_operand.vmem [shape: f32[1,4], index: 4, kind: input, shape index: {}]
  %s5 = inlined_call_operand.vmem [shape: f32[32,4], index: 5, kind: output, shape index: {}]
  %s6 = sld [smem:[#allocation0]]
  $region53: #{gatnet_forward.7} parent=0
    _
  %s8 = ssub.s32 1, %s6
  %s9 = scalar_select 0, %s8, %s6
  loop: start=0, step=1, limit=4
  $region2: #{gatnet_forward.7} parent=0 // loop_pre_header
    _
  $region3: #{gatnet_forward.7} parent=0 // loop_header
    %s11 = sphi 0, %s15
    %p12 = scmp.ge.s32.totalorder %s11, 4
    %s21 = sphi 0, %s23
    %s24 = sphi 0, %s21
    %s25 = sphi 0, %s24
    %s41 = sphi 0, %s25
    %s45 = sphi 0, %s45
    %s47 = sphi 0, %s45
    %s48 = sphi 0, %s47
    %s62 = sphi 0, %s48
    %s66 = sphi 0, %s66
    %s68 = sphi 0, %s66
    %s69 = sphi 0, %s68
    %s83 = sphi 0, %s69
    %s89 = sphi 0, %s91
    %s92 = sphi 0, %s89
    %s93 = sphi 0, %s92
    %s109 = sphi 0, %s93
    %s113 = sphi 0, %s113
    %s115 = sphi 0, %s113
    %s116 = sphi 0, %s115
    %s130 = sphi 0, %s116
    %s136 = sphi 0, %s138
    %s139 = sphi 0, %s136
    %s140 = sphi 0, %s139
    %s156 = sphi 0, %s140
  $region4: #{gatnet_forward.7} parent=0 // loop_header_branch
    %14 = sbr.rel (%p12) target = $region8
  $region5: #{gatnet_forward.7} parent=0 // loop_body
    %s16 = ssub.s32 %s11, 1
    %s17 = ssub.s32 %s11, 2
    %s18 = sadd.s32 %s11, 1
    %s19 = ssub.s32 %s11, %s18
    %p20 = scmp.eq.s32.totalorder %s19, 0
    %s22 = sadd.s32 %s21, 1
    %s23 = scalar_select %p20, %s21, %s22
    %p26 = pneg %p20
    %p27 = scmp.eq.s32.totalorder %s11, 1
    %p28 = por %p26, %p27
    %p29 = scmp.ne.s32.totalorder %s21, %s24
    %p30 = scmp.eq.s32.totalorder %s11, 0
    %p31 = por %p29, %p30
    %p32 = scmp.ne.s32.totalorder %s21, %s24
    %p33 = scmp.eq.s32.totalorder %s16, 1
    %p34 = por %p32, %p33
    %p35 = scmp.ne.s32.totalorder %s24, %s25
    %p36 = scmp.eq.s32.totalorder %s16, 0
    %p37 = por %p35, %p36
    %p38 = scmp.ne.s32.totalorder %s24, %s25
    %p39 = scmp.eq.s32.totalorder %s17, 1
    %p40 = por %p38, %p39
    %p42 = scmp.ne.s32.totalorder %s25, %s41
    %p43 = scmp.eq.s32.totalorder %s17, 0
    %p44 = por %p42, %p43
    %s46 = sadd.s32 %s45, 1
    %p49 = scmp.eq.s32.totalorder %s11, 1
    %p50 = scmp.ne.s32.totalorder %s45, %s47
    %p51 = scmp.eq.s32.totalorder %s11, 0
    %p52 = por %p50, %p51
    %p53 = scmp.ne.s32.totalorder %s45, %s47
    %p54 = scmp.eq.s32.totalorder %s16, 1
    %p55 = por %p53, %p54
    %p56 = scmp.ne.s32.totalorder %s47, %s48
    %p57 = scmp.eq.s32.totalorder %s16, 0
    %p58 = por %p56, %p57
    %p59 = scmp.ne.s32.totalorder %s47, %s48
    %p60 = scmp.eq.s32.totalorder %s17, 1
    %p61 = por %p59, %p60
    %p63 = scmp.ne.s32.totalorder %s48, %s62
    %p64 = scmp.eq.s32.totalorder %s17, 0
    %p65 = por %p63, %p64
    %s67 = sadd.s32 %s66, 1
    %p70 = scmp.eq.s32.totalorder %s11, 1
    %p71 = scmp.ne.s32.totalorder %s66, %s68
    %p72 = scmp.eq.s32.totalorder %s11, 0
    %p73 = por %p71, %p72
    %p74 = scmp.ne.s32.totalorder %s66, %s68
    %p75 = scmp.eq.s32.totalorder %s16, 1
    %p76 = por %p74, %p75
    %p77 = scmp.ne.s32.totalorder %s68, %s69
    %p78 = scmp.eq.s32.totalorder %s16, 0
    %p79 = por %p77, %p78
    %p80 = scmp.ne.s32.totalorder %s68, %s69
    %p81 = scmp.eq.s32.totalorder %s17, 1
    %p82 = por %p80, %p81
    %p84 = scmp.ne.s32.totalorder %s69, %s83
    %p85 = scmp.eq.s32.totalorder %s17, 0
    %p86 = por %p84, %p85
    %s87 = ssub.s32 %s11, %s18
    %p88 = scmp.eq.s32.totalorder %s87, 0
    %s90 = sadd.s32 %s89, 1
    %s91 = scalar_select %p88, %s89, %s90
    %p94 = pneg %p88
    %p95 = scmp.eq.s32.totalorder %s11, 1
    %p96 = por %p94, %p95
    %p97 = scmp.ne.s32.totalorder %s89, %s92
    %p98 = scmp.eq.s32.totalorder %s11, 0
    %p99 = por %p97, %p98
    %p100 = scmp.ne.s32.totalorder %s89, %s92
    %p101 = scmp.eq.s32.totalorder %s16, 1
    %p102 = por %p100, %p101
    %p103 = scmp.ne.s32.totalorder %s92, %s93
    %p104 = scmp.eq.s32.totalorder %s16, 0
    %p105 = por %p103, %p104
    %p106 = scmp.ne.s32.totalorder %s92, %s93
    %p107 = scmp.eq.s32.totalorder %s17, 1
    %p108 = por %p106, %p107
    %p110 = scmp.ne.s32.totalorder %s93, %s109
    %p111 = scmp.eq.s32.totalorder %s17, 0
    %p112 = por %p110, %p111
    %s114 = sadd.s32 %s113, 1
    %p117 = scmp.eq.s32.totalorder %s11, 1
    %p118 = scmp.ne.s32.totalorder %s113, %s115
    %p119 = scmp.eq.s32.totalorder %s11, 0
    %p120 = por %p118, %p119
    %p121 = scmp.ne.s32.totalorder %s113, %s115
    %p122 = scmp.eq.s32.totalorder %s16, 1
    %p123 = por %p121, %p122
    %p124 = scmp.ne.s32.totalorder %s115, %s116
    %p125 = scmp.eq.s32.totalorder %s16, 0
    %p126 = por %p124, %p125
    %p127 = scmp.ne.s32.totalorder %s115, %s116
    %p128 = scmp.eq.s32.totalorder %s17, 1
    %p129 = por %p127, %p128
    %p131 = scmp.ne.s32.totalorder %s116, %s130
    %p132 = scmp.eq.s32.totalorder %s17, 0
    %p133 = por %p131, %p132
    %s134 = ssub.s32 %s11, %s18
    %p135 = scmp.eq.s32.totalorder %s134, 0
    %s137 = sadd.s32 %s136, 1
    %s138 = scalar_select %p135, %s136, %s137
    %p141 = pneg %p135
    %p142 = scmp.eq.s32.totalorder %s11, 1
    %p143 = por %p141, %p142
    %p144 = scmp.ne.s32.totalorder %s136, %s139
    %p145 = scmp.eq.s32.totalorder %s11, 0
    %p146 = por %p144, %p145
    %p147 = scmp.ne.s32.totalorder %s136, %s139
    %p148 = scmp.eq.s32.totalorder %s16, 1
    %p149 = por %p147, %p148
    %p150 = scmp.ne.s32.totalorder %s139, %s140
    %p151 = scmp.eq.s32.totalorder %s16, 0
    %p152 = por %p150, %p151
    %p153 = scmp.ne.s32.totalorder %s139, %s140
    %p154 = scmp.eq.s32.totalorder %s17, 1
    %p155 = por %p153, %p154
    %p157 = scmp.ne.s32.totalorder %s140, %s156
    %p158 = scmp.eq.s32.totalorder %s17, 0
    %p159 = por %p157, %p158
    %p160 = scmp.le.s32.totalorder 1, %s11
    %p161 = scmp.lt.s32.totalorder %s11, 3
    %p162 = pnand %p160, %p161
    %p163 = pneg %p162
    // Predicated region
    $region9: #{gatnet_forward.7} parent=5 // pred_check
      _
    $region10: #{gatnet_forward.7} parent=5 // pred_check_branch
      %165 = sbr.rel (%p162) target = $region12
    $region11: #{gatnet_forward.7} parent=5 // pred_region
      %s166 = ssub.s32 %s11, 1
      // Predicated region
      $region13: #{gatnet_forward.7} parent=11 // pred_check
        %p167 = pneg %p58
      $region14: #{gatnet_forward.7} parent=11 // pred_check_branch
        %169 = sbr.rel (%p167) target = $region16
      $region15: #{gatnet_forward.7} parent=11 // pred_region
        _
      $region16: #{gatnet_forward.7} parent=11 // pred_fallthru
        _
      // Predicated region
      $region17: #{gatnet_forward.7} parent=11 // pred_check
        %p170 = pneg %p79
      $region18: #{gatnet_forward.7} parent=11 // pred_check_branch
        %172 = sbr.rel (%p170) target = $region20
      $region19: #{gatnet_forward.7} parent=11 // pred_region
        _
      $region20: #{gatnet_forward.7} parent=11 // pred_fallthru
        _
      // Predicated region
      $region21: #{gatnet_forward.7} parent=11 // pred_check
        %p173 = pneg %p126
      $region22: #{gatnet_forward.7} parent=11 // pred_check_branch
        %175 = sbr.rel (%p173) target = $region24
      $region23: #{gatnet_forward.7} parent=11 // pred_region
        _
      $region24: #{gatnet_forward.7} parent=11 // pred_fallthru
        _
    $region12: #{gatnet_forward.7} parent=5 // pred_fallthru
      _
    %p176 = scmp.lt.s32.totalorder %s11, 2
    // Predicated region
    $region25: #{gatnet_forward.7} parent=5 // pred_check
      %p177 = pneg %p176
    $region26: #{gatnet_forward.7} parent=5 // pred_check_branch
      %179 = sbr.rel (%p177) target = $region28
    $region27: #{gatnet_forward.7} parent=5 // pred_region
      // Predicated region
      $region29: #{gatnet_forward.7} parent=27 // pred_check
        %p180 = pneg %p31
      $region30: #{gatnet_forward.7} parent=27 // pred_check_branch
        %182 = sbr.rel (%p180) target = $region32
      $region31: #{gatnet_forward.7} parent=27 // pred_region
        %s183 = smul.u32 2, %s11
        %p184 = scmp.lt.s32.totalorder %s183, 3
        %s185 = scalar_select %p184, %s183, 3
        %s186 = smul.addr %s185, 4
        %s187 = scalar_lea.vmem %s0, %s186
        %s188 = smul.u32 2, %s11
      $region32: #{gatnet_forward.7} parent=27 // pred_fallthru
        _
      // Predicated region
      $region33: #{gatnet_forward.7} parent=27 // pred_check
        %p189 = pneg %p99
      $region34: #{gatnet_forward.7} parent=27 // pred_check_branch
        %191 = sbr.rel (%p189) target = $region36
      $region35: #{gatnet_forward.7} parent=27 // pred_region
        %s192 = smul.u32 2, %s11
        %p193 = scmp.lt.s32.totalorder %s192, 3
        %s194 = scalar_select %p193, %s192, 3
        %s195 = smul.addr %s194, 8
        %s196 = scalar_lea.vmem %s3, %s195
        %s197 = smul.u32 2, %s11
      $region36: #{gatnet_forward.7} parent=27 // pred_fallthru
        _
    $region28: #{gatnet_forward.7} parent=5 // pred_fallthru
      _
    %p198 = scmp.le.s32.totalorder 1, %s11
    %p199 = scmp.lt.s32.totalorder %s11, 3
    %p200 = pnand %p198, %p199
    %p201 = pneg %p200
    // Predicated region
    $region37: #{gatnet_forward.7} parent=5 // pred_check
      _
    $region38: #{gatnet_forward.7} parent=5 // pred_check_branch
      %203 = sbr.rel (%p200) target = $region40
    $region39: #{gatnet_forward.7} parent=5 // pred_region
      %s204 = ssub.s32 %s11, 1
      %s205 = smul.u32 2, %s16
      %p206 = scmp.lt.s32.totalorder %s205, 3
      %s207 = scalar_select %p206, %s205, 3
      %s208 = smul.addr %s207, 4
      %s209 = scalar_lea.vmem %s0, %s208
      %p210 = pneg %p37
      %p211 = pneg %p34
      %p212 = pneg %p58
      %p213 = pneg %p55
      %p214 = pneg %p79
      %p215 = pneg %p76
      %s216 = smul.u32 2, %s16
      %p217 = scmp.lt.s32.totalorder %s216, 3
      %s218 = scalar_select %p217, %s216, 3
      %s219 = smul.addr %s218, 8
      %s220 = scalar_lea.vmem %s3, %s219
      %p221 = pneg %p105
      %p222 = pneg %p102
      %p223 = pneg %p126
      %p224 = pneg %p123
      %p225 = pneg %p152
      %p226 = pneg %p149
      %s227 = smul.u32 2, %s16
      %p228 = scmp.lt.s32.totalorder %s227, 3
      %s229 = scalar_select %p228, %s227, 3
      %s230 = smul.addr %s229, 8
      %s231 = scalar_lea.vmem %s5, %s230
      %s232 = smul.u32 2, %s16
      %p233 = scmp.lt.s32.totalorder %s232, 3
      %s234 = scalar_select %p233, %s232, 3
      %s235 = smul.addr %s234, 4
      %s236 = scalar_lea.vmem %s0, %s235
      %s237 = smul.u32 2, %s16
      %s238 = smul.u32 2, %s16
      %p239 = scmp.lt.s32.totalorder %s238, 3
      %s240 = scalar_select %p239, %s238, 3
      %s241 = smul.addr %s240, 8
      %s242 = scalar_lea.vmem %s3, %s241
      %s243 = smul.u32 2, %s16
      %s244 = smul.u32 2, %s16
      %p245 = scmp.lt.s32.totalorder %s244, 3
      %s246 = scalar_select %p245, %s244, 3
      %s247 = smul.addr %s246, 8
      %s248 = scalar_lea.vmem %s5, %s247
      %s249 = smul.u32 2, %s16
      %v253 = vld [vmem:[%s236] sm:$0xf]
      %v254 = vld [vmem:[%s236 + $0x4] sm:$0xf]
      %vm255 = vcmp.gt.bf16.partialorder %v253, 0
      %vm256 = vcmp.gt.bf16.partialorder %v254, 0
      %v257 = vld [vmem:[%s1] sm:$0xf]
      %v258 = vld [vmem:[%s1 + $0x4] sm:$0xf]
      %v259 = vld [vmem:[%s1 + $0x8] sm:$0xf]
      %v260 = vld [vmem:[%s1 + $0xc] sm:$0xf]
      %v261 = vld [vmem:[%s2] sm:$0x1]
      %v262 = vld [vmem:[%s242] sm:$0xff]
      %v263 = vld [vmem:[%s242 + $0x8] sm:$0xff]
      %265 = vset.pattern.permute.xlu0 0
      %266 = vperm.xlu0 %265, %v262
      %v267 = vpop.permute.xlu0 %266
      %270 = vset.pattern.permute.xlu0 0
      %271 = vperm.xlu0 %270, %v263
      %v272 = vpop.permute.xlu0 %271
      %v275 = vlaneseq
      %v276 = vshrl.u32 %v275, 7
      %v277 = vsub.s32 0, %v276
      %v278 = vrot.slane %v261, %v277
      %v280 = vadd.f32 %v267, %v278
      %v281 = vadd.f32 %v272, %v278
      %vm282 = vcmp.gt.f32.partialorder %v280, 0.0
      %vm283 = vcmp.gt.f32.partialorder %v281, 0.0
      %v284 = vmul.f32 %v280, 0.2
      %v285 = vmul.f32 %v281, 0.2
      %v286 = vsel %vm282, %v280, %v284
      %v287 = vsel %vm283, %v281, %v285
      %v288 = vsel %vm255, 65537, 0
      %v289 = vsel %vm256, 65537, 0
      %v290 = vunpack.c.l.b16 %v288
      %v291 = vunpack.c.l.b16 %v289
      %vm292 = vcmp.ne.s32.totalorder %v290, 0
      %vm293 = vcmp.ne.s32.totalorder %v291, 0
      %v294 = vsel %vm292, %v286, -1e+30
      %v295 = vsel %vm293, %v287, -1e+30
      %vm296 = vcmask 261120
      %v297 = vsel %vm296, %v294, -inf
      %298 = vmax.xlane.f32.xlu0 %v297
      %v299 = vpop.xlane.xlu0 %298
      %v300 = vsel %vm296, %v295, -inf
      %301 = vmax.xlane.f32.xlu0 %v300
      %v302 = vpop.xlane.xlu0 %301
      %v303 = vsub.f32 %v294, %v299
      %v304 = vsub.f32 %v295, %v302
      %v305 = vmul.f32 %v303, 1.442695
      %v306 = vpow.pop %v305
      %v307 = vmul.f32 %v304, 1.442695
      %v308 = vpow.pop %v307
      %v309 = vsel %vm292, %v306, 0.0
      %v310 = vsel %vm293, %v308, 0.0
      %v311 = vsel %vm296, %v309, 0.0
      %312 = vadd.xlane.f32.xlu0 %v311
      %v313 = vpop.xlane.xlu0 %312
      %v314 = vsel %vm296, %v310, 0.0
      %315 = vadd.xlane.f32.xlu0 %v314
      %v316 = vpop.xlane.xlu0 %315
      %v317 = vmax.f32 %v313, 1e-09
      %v318 = vmax.f32 %v316, 1e-09
      %v319 = vrcp.pop %v317
      %v320 = vrcp.pop %v318
      %v321 = vmul.f32 %v309, %v319
      %v322 = vmul.f32 %v310, %v320
      %v323 = vpack.c.bf16 %v322, %v321
      %v324 = vld [vmem:[%s4] sm:$0x1]
      %v326 = vlaneseq
      %v327 = vshrl.u32 %v326, 7
      %v328 = vsub.s32 0, %v327
      %v329 = vrot.slane %v324, %v328
      %v335 = vunpack.c.l.b16 %v257
      %v336 = vunpack.c.l.b16 %v258
      %v337 = vunpack.c.l.b16 %v259
      %v338 = vunpack.c.l.b16 %v260
      %v339 = vpack.c.b16 %v336, %v335
      %v340 = vpack.c.b16 %v338, %v337
      %v344 = vsel %vm296, %v323, 0
      %346 = vmatprep.subr.bf16.mxu0 0
      %347 = vmatpush1.bf16.msra.mxu0 0
      %348 = vmatprep.subr.bf16.mxu0 0
      %349 = vmatpush1.bf16.msra.mxu0 0
      %350 = vmatprep.subr.bf16.mxu0 0
      %351 = vmatpush1.bf16.msra.mxu0 0
      %352 = vmatprep.subr.bf16.mxu0 0
      %353 = vmatpush1.bf16.msra.mxu0 0
      %354 = vmatprep.subr.bf16.mxu0 0
      %355 = vmatpush1.bf16.msra.mxu0 0
      %356 = vmatprep.subr.bf16.mxu0 0
      %357 = vmatpush1.bf16.msra.mxu0 0
      %358 = vmatprep.subr.bf16.mxu0 0
      %359 = vmatpush1.bf16.msra.mxu0 %v340
      %360 = vmatprep.subr.bf16.mxu0 0
      %361 = vmatpush1.bf16.msra.mxu0 %v339
      %362 = vmatprep.subr.bf16.mxu0 0
      %363 = vmatpush2.bf16.msra.mxu0 0
      %364 = vmatprep.subr.bf16.mxu0 0
      %365 = vmatpush2.bf16.msra.mxu0 0
      %366 = vmatprep.subr.bf16.mxu0 0
      %367 = vmatpush2.bf16.msra.mxu0 0
      %368 = vmatprep.subr.bf16.mxu0 0
      %369 = vmatpush2.bf16.msra.mxu0 0
      %370 = vmatprep.subr.bf16.mxu0 0
      %371 = vmatpush2.bf16.msra.mxu0 0
      %372 = vmatprep.subr.bf16.mxu0 0
      %373 = vmatpush2.bf16.msra.mxu0 0
      %374 = vmatprep.subr.bf16.mxu0 0
      %375 = vmatpush2.bf16.msra.mxu0 0
      %376 = vmatprep.subr.bf16.mxu0 0
      %377 = vmatpush2.bf16.msra.mxu0 0
      %378 = vmatprep.mubr.bf16.mxu0 0
      %379 = vmatmul.mubr.bf16.gmra.mxu0 %v344
      %v380 = vpop.f32.mrf.mxu0
      %v381 = vadd.f32 %v329, %v380
      %v382 = vpop.f32.mrf.mxu0
      %v383 = vpop.f32.mrf.mxu0
      %v384 = vadd.f32 %v329, %v383
      %v385 = vpop.f32.mrf.mxu0
      %386 = vdwg.mxu0
      %vm387 = vcmask 31744
      %388 = vst.msk [vmem:[%s248] sm:$0xff] %vm387, %v381
      %389 = vst.msk [vmem:[%s248 + $0x8] sm:$0xff] %vm387, %v384
      %s390 = smul.u32 2, %s16
      %p391 = scmp.lt.s32.totalorder %s390, 3
      %s392 = scalar_select %p391, %s390, 3
      %s393 = smul.addr %s392, 8
      %s394 = scalar_lea.vmem %s5, %s393
      // Predicated region
      $region41: #{gatnet_forward.7} parent=39 // pred_check
        %p395 = pneg %p149
      $region42: #{gatnet_forward.7} parent=39 // pred_check_branch
        %397 = sbr.rel (%p395) target = $region44
      $region43: #{gatnet_forward.7} parent=39 // pred_region
        %s398 = smul.u32 2, %s16
      $region44: #{gatnet_forward.7} parent=39 // pred_fallthru
        _
    $region40: #{gatnet_forward.7} parent=5 // pred_fallthru
      _
    %p399 = scmp.le.s32.totalorder 2, %s11
    // Predicated region
    $region45: #{gatnet_forward.7} parent=5 // pred_check
      %p400 = pneg %p399
    $region46: #{gatnet_forward.7} parent=5 // pred_check_branch
      %402 = sbr.rel (%p400) target = $region48
    $region47: #{gatnet_forward.7} parent=5 // pred_region
      %s403 = ssub.s32 %s11, 2
      // Predicated region
      $region49: #{gatnet_forward.7} parent=47 // pred_check
        %p404 = pneg %p155
      $region50: #{gatnet_forward.7} parent=47 // pred_check_branch
        %406 = sbr.rel (%p404) target = $region52
      $region51: #{gatnet_forward.7} parent=47 // pred_region
        %s407 = smul.u32 2, %s17
        %p408 = scmp.lt.s32.totalorder %s407, 3
        %s409 = scalar_select %p408, %s407, 3
        %s410 = smul.addr %s409, 8
        %s411 = scalar_lea.vmem %s5, %s410
      $region52: #{gatnet_forward.7} parent=47 // pred_fallthru
        _
    $region48: #{gatnet_forward.7} parent=5 // pred_fallthru
      _
  $region6: #{gatnet_forward.7} parent=0 // loop_footer
    %s15 = sadd.s32 1, %s11
  $region7: #{gatnet_forward.7} parent=0 // loop_footer_branch
    %10 = sbr.rel target = $region3
  $region8: #{gatnet_forward.7} parent=0 // loop_exit
    _

// kernel: gatnet_forward.4
$region0: #{gatnet_forward.4}
  #allocation0 [shape = 'u32[]', space=smem, size = 0x4, offset = 0x4, fixed_abs, tag = 'smem constant byte address 0x4 - core index']
  #allocation1 [shape = 'u32[144,128]{1,0:T(1,128)}', space=vmem, size = 0x12000, scoped, tag = 'internal scratch']
  %s0 = inlined_call_operand.vmem [shape: f32[32,16], index: 0, kind: input, shape index: {}]
  %s1 = inlined_call_operand.vmem [shape: bf16[16,16], index: 1, kind: input, shape index: {}]
  %s2 = inlined_call_operand.vmem [shape: f32[16,2], index: 2, kind: input, shape index: {}]
  %s3 = inlined_call_operand.vmem [shape: f32[16,2], index: 3, kind: input, shape index: {}]
  %s4 = inlined_call_operand.vmem [shape: bf16[32,16], index: 4, kind: output, shape index: {0}]
  %s5 = inlined_call_operand.vmem [shape: f32[32,2], index: 5, kind: output, shape index: {1}]
  %s6 = inlined_call_operand.vmem [shape: f32[32,2], index: 6, kind: output, shape index: {2}]
  %7 = xla_tuple %s4, %s5, %s6
  %s8 = sld [smem:[#allocation0]]
  $region65: #{gatnet_forward.4} parent=0
    _
  %s10 = ssub.s32 1, %s8
  %s11 = scalar_select 0, %s10, %s8
  loop: start=0, step=1, limit=4
  $region2: #{gatnet_forward.4} parent=0 // loop_pre_header
    _
  $region3: #{gatnet_forward.4} parent=0 // loop_header
    %s13 = sphi 0, %s17
    %p14 = scmp.ge.s32.totalorder %s13, 4
    %s23 = sphi 0, %s25
    %s26 = sphi 0, %s23
    %s27 = sphi 0, %s26
    %s43 = sphi 0, %s27
    %s47 = sphi 0, %s47
    %s49 = sphi 0, %s47
    %s50 = sphi 0, %s49
    %s64 = sphi 0, %s50
    %s68 = sphi 0, %s68
    %s70 = sphi 0, %s68
    %s71 = sphi 0, %s70
    %s85 = sphi 0, %s71
    %s89 = sphi 0, %s89
    %s91 = sphi 0, %s89
    %s92 = sphi 0, %s91
    %s106 = sphi 0, %s92
    %s112 = sphi 0, %s114
    %s115 = sphi 0, %s112
    %s116 = sphi 0, %s115
    %s132 = sphi 0, %s116
    %s138 = sphi 0, %s140
    %s141 = sphi 0, %s138
    %s142 = sphi 0, %s141
    %s158 = sphi 0, %s142
    %s164 = sphi 0, %s166
    %s167 = sphi 0, %s164
    %s168 = sphi 0, %s167
    %s184 = sphi 0, %s168
  $region4: #{gatnet_forward.4} parent=0 // loop_header_branch
    %16 = sbr.rel (%p14) target = $region8
  $region5: #{gatnet_forward.4} parent=0 // loop_body
    %s18 = ssub.s32 %s13, 1
    %s19 = ssub.s32 %s13, 2
    %s20 = sadd.s32 %s13, 1
    %s21 = ssub.s32 %s13, %s20
    %p22 = scmp.eq.s32.totalorder %s21, 0
    %s24 = sadd.s32 %s23, 1
    %s25 = scalar_select %p22, %s23, %s24
    %p28 = pneg %p22
    %p29 = scmp.eq.s32.totalorder %s13, 1
    %p30 = por %p28, %p29
    %p31 = scmp.ne.s32.totalorder %s23, %s26
    %p32 = scmp.eq.s32.totalorder %s13, 0
    %p33 = por %p31, %p32
    %p34 = scmp.ne.s32.totalorder %s23, %s26
    %p35 = scmp.eq.s32.totalorder %s18, 1
    %p36 = por %p34, %p35
    %p37 = scmp.ne.s32.totalorder %s26, %s27
    %p38 = scmp.eq.s32.totalorder %s18, 0
    %p39 = por %p37, %p38
    %p40 = scmp.ne.s32.totalorder %s26, %s27
    %p41 = scmp.eq.s32.totalorder %s19, 1
    %p42 = por %p40, %p41
    %p44 = scmp.ne.s32.totalorder %s27, %s43
    %p45 = scmp.eq.s32.totalorder %s19, 0
    %p46 = por %p44, %p45
    %s48 = sadd.s32 %s47, 1
    %p51 = scmp.eq.s32.totalorder %s13, 1
    %p52 = scmp.ne.s32.totalorder %s47, %s49
    %p53 = scmp.eq.s32.totalorder %s13, 0
    %p54 = por %p52, %p53
    %p55 = scmp.ne.s32.totalorder %s47, %s49
    %p56 = scmp.eq.s32.totalorder %s18, 1
    %p57 = por %p55, %p56
    %p58 = scmp.ne.s32.totalorder %s49, %s50
    %p59 = scmp.eq.s32.totalorder %s18, 0
    %p60 = por %p58, %p59
    %p61 = scmp.ne.s32.totalorder %s49, %s50
    %p62 = scmp.eq.s32.totalorder %s19, 1
    %p63 = por %p61, %p62
    %p65 = scmp.ne.s32.totalorder %s50, %s64
    %p66 = scmp.eq.s32.totalorder %s19, 0
    %p67 = por %p65, %p66
    %s69 = sadd.s32 %s68, 1
    %p72 = scmp.eq.s32.totalorder %s13, 1
    %p73 = scmp.ne.s32.totalorder %s68, %s70
    %p74 = scmp.eq.s32.totalorder %s13, 0
    %p75 = por %p73, %p74
    %p76 = scmp.ne.s32.totalorder %s68, %s70
    %p77 = scmp.eq.s32.totalorder %s18, 1
    %p78 = por %p76, %p77
    %p79 = scmp.ne.s32.totalorder %s70, %s71
    %p80 = scmp.eq.s32.totalorder %s18, 0
    %p81 = por %p79, %p80
    %p82 = scmp.ne.s32.totalorder %s70, %s71
    %p83 = scmp.eq.s32.totalorder %s19, 1
    %p84 = por %p82, %p83
    %p86 = scmp.ne.s32.totalorder %s71, %s85
    %p87 = scmp.eq.s32.totalorder %s19, 0
    %p88 = por %p86, %p87
    %s90 = sadd.s32 %s89, 1
    %p93 = scmp.eq.s32.totalorder %s13, 1
    %p94 = scmp.ne.s32.totalorder %s89, %s91
    %p95 = scmp.eq.s32.totalorder %s13, 0
    %p96 = por %p94, %p95
    %p97 = scmp.ne.s32.totalorder %s89, %s91
    %p98 = scmp.eq.s32.totalorder %s18, 1
    %p99 = por %p97, %p98
    %p100 = scmp.ne.s32.totalorder %s91, %s92
    %p101 = scmp.eq.s32.totalorder %s18, 0
    %p102 = por %p100, %p101
    %p103 = scmp.ne.s32.totalorder %s91, %s92
    %p104 = scmp.eq.s32.totalorder %s19, 1
    %p105 = por %p103, %p104
    %p107 = scmp.ne.s32.totalorder %s92, %s106
    %p108 = scmp.eq.s32.totalorder %s19, 0
    %p109 = por %p107, %p108
    %s110 = ssub.s32 %s13, %s20
    %p111 = scmp.eq.s32.totalorder %s110, 0
    %s113 = sadd.s32 %s112, 1
    %s114 = scalar_select %p111, %s112, %s113
    %p117 = pneg %p111
    %p118 = scmp.eq.s32.totalorder %s13, 1
    %p119 = por %p117, %p118
    %p120 = scmp.ne.s32.totalorder %s112, %s115
    %p121 = scmp.eq.s32.totalorder %s13, 0
    %p122 = por %p120, %p121
    %p123 = scmp.ne.s32.totalorder %s112, %s115
    %p124 = scmp.eq.s32.totalorder %s18, 1
    %p125 = por %p123, %p124
    %p126 = scmp.ne.s32.totalorder %s115, %s116
    %p127 = scmp.eq.s32.totalorder %s18, 0
    %p128 = por %p126, %p127
    %p129 = scmp.ne.s32.totalorder %s115, %s116
    %p130 = scmp.eq.s32.totalorder %s19, 1
    %p131 = por %p129, %p130
    %p133 = scmp.ne.s32.totalorder %s116, %s132
    %p134 = scmp.eq.s32.totalorder %s19, 0
    %p135 = por %p133, %p134
    %s136 = ssub.s32 %s13, %s20
    %p137 = scmp.eq.s32.totalorder %s136, 0
    %s139 = sadd.s32 %s138, 1
    %s140 = scalar_select %p137, %s138, %s139
    %p143 = pneg %p137
    %p144 = scmp.eq.s32.totalorder %s13, 1
    %p145 = por %p143, %p144
    %p146 = scmp.ne.s32.totalorder %s138, %s141
    %p147 = scmp.eq.s32.totalorder %s13, 0
    %p148 = por %p146, %p147
    %p149 = scmp.ne.s32.totalorder %s138, %s141
    %p150 = scmp.eq.s32.totalorder %s18, 1
    %p151 = por %p149, %p150
    %p152 = scmp.ne.s32.totalorder %s141, %s142
    %p153 = scmp.eq.s32.totalorder %s18, 0
    %p154 = por %p152, %p153
    %p155 = scmp.ne.s32.totalorder %s141, %s142
    %p156 = scmp.eq.s32.totalorder %s19, 1
    %p157 = por %p155, %p156
    %p159 = scmp.ne.s32.totalorder %s142, %s158
    %p160 = scmp.eq.s32.totalorder %s19, 0
    %p161 = por %p159, %p160
    %s162 = ssub.s32 %s13, %s20
    %p163 = scmp.eq.s32.totalorder %s162, 0
    %s165 = sadd.s32 %s164, 1
    %s166 = scalar_select %p163, %s164, %s165
    %p169 = pneg %p163
    %p170 = scmp.eq.s32.totalorder %s13, 1
    %p171 = por %p169, %p170
    %p172 = scmp.ne.s32.totalorder %s164, %s167
    %p173 = scmp.eq.s32.totalorder %s13, 0
    %p174 = por %p172, %p173
    %p175 = scmp.ne.s32.totalorder %s164, %s167
    %p176 = scmp.eq.s32.totalorder %s18, 1
    %p177 = por %p175, %p176
    %p178 = scmp.ne.s32.totalorder %s167, %s168
    %p179 = scmp.eq.s32.totalorder %s18, 0
    %p180 = por %p178, %p179
    %p181 = scmp.ne.s32.totalorder %s167, %s168
    %p182 = scmp.eq.s32.totalorder %s19, 1
    %p183 = por %p181, %p182
    %p185 = scmp.ne.s32.totalorder %s168, %s184
    %p186 = scmp.eq.s32.totalorder %s19, 0
    %p187 = por %p185, %p186
    %p188 = scmp.le.s32.totalorder 1, %s13
    %p189 = scmp.lt.s32.totalorder %s13, 3
    %p190 = pnand %p188, %p189
    %p191 = pneg %p190
    // Predicated region
    $region9: #{gatnet_forward.4} parent=5 // pred_check
      _
    $region10: #{gatnet_forward.4} parent=5 // pred_check_branch
      %193 = sbr.rel (%p190) target = $region12
    $region11: #{gatnet_forward.4} parent=5 // pred_region
      %s194 = ssub.s32 %s13, 1
      // Predicated region
      $region13: #{gatnet_forward.4} parent=11 // pred_check
        %p195 = pneg %p60
      $region14: #{gatnet_forward.4} parent=11 // pred_check_branch
        %197 = sbr.rel (%p195) target = $region16
      $region15: #{gatnet_forward.4} parent=11 // pred_region
        _
      $region16: #{gatnet_forward.4} parent=11 // pred_fallthru
        _
      // Predicated region
      $region17: #{gatnet_forward.4} parent=11 // pred_check
        %p198 = pneg %p81
      $region18: #{gatnet_forward.4} parent=11 // pred_check_branch
        %200 = sbr.rel (%p198) target = $region20
      $region19: #{gatnet_forward.4} parent=11 // pred_region
        _
      $region20: #{gatnet_forward.4} parent=11 // pred_fallthru
        _
      // Predicated region
      $region21: #{gatnet_forward.4} parent=11 // pred_check
        %p201 = pneg %p102
      $region22: #{gatnet_forward.4} parent=11 // pred_check_branch
        %203 = sbr.rel (%p201) target = $region24
      $region23: #{gatnet_forward.4} parent=11 // pred_region
        _
      $region24: #{gatnet_forward.4} parent=11 // pred_fallthru
        _
    $region12: #{gatnet_forward.4} parent=5 // pred_fallthru
      _
    %p204 = scmp.lt.s32.totalorder %s13, 2
    // Predicated region
    $region25: #{gatnet_forward.4} parent=5 // pred_check
      %p205 = pneg %p204
    $region26: #{gatnet_forward.4} parent=5 // pred_check_branch
      %207 = sbr.rel (%p205) target = $region28
    $region27: #{gatnet_forward.4} parent=5 // pred_region
      // Predicated region
      $region29: #{gatnet_forward.4} parent=27 // pred_check
        %p208 = pneg %p33
      $region30: #{gatnet_forward.4} parent=27 // pred_check_branch
        %210 = sbr.rel (%p208) target = $region32
      $region31: #{gatnet_forward.4} parent=27 // pred_region
        %s211 = smul.u32 2, %s13
        %p212 = scmp.lt.s32.totalorder %s211, 3
        %s213 = scalar_select %p212, %s211, 3
        %s214 = smul.addr %s213, 8
        %s215 = scalar_lea.vmem %s0, %s214
        %s216 = smul.u32 2, %s13
      $region32: #{gatnet_forward.4} parent=27 // pred_fallthru
        _
    $region28: #{gatnet_forward.4} parent=5 // pred_fallthru
      _
    %p217 = scmp.le.s32.totalorder 1, %s13
    %p218 = scmp.lt.s32.totalorder %s13, 3
    %p219 = pnand %p217, %p218
    %p220 = pneg %p219
    // Predicated region
    $region33: #{gatnet_forward.4} parent=5 // pred_check
      _
    $region34: #{gatnet_forward.4} parent=5 // pred_check_branch
      %222 = sbr.rel (%p219) target = $region36
    $region35: #{gatnet_forward.4} parent=5 // pred_region
      %s223 = ssub.s32 %s13, 1
      %s224 = smul.u32 2, %s18
      %p225 = scmp.lt.s32.totalorder %s224, 3
      %s226 = scalar_select %p225, %s224, 3
      %s227 = smul.addr %s226, 8
      %s228 = scalar_lea.vmem %s0, %s227
      %p229 = pneg %p39
      %p230 = pneg %p36
      %p231 = pneg %p60
      %p232 = pneg %p57
      %p233 = pneg %p81
      %p234 = pneg %p78
      %p235 = pneg %p102
      %p236 = pneg %p99
      %p237 = pneg %p128
      %p238 = pneg %p125
      %s239 = smul.u32 2, %s18
      %p240 = scmp.lt.s32.totalorder %s239, 3
      %s241 = scalar_select %p240, %s239, 3
      %s242 = smul.addr %s241, 4
      %s243 = scalar_lea.vmem %s4, %s242
      %p244 = pneg %p154
      %p245 = pneg %p151
      %s246 = smul.u32 2, %s18
      %p247 = scmp.lt.s32.totalorder %s246, 3
      %s248 = scalar_select %p247, %s246, 3
      %s249 = smul.addr %s248, 8
      %s250 = scalar_lea.vmem %s5, %s249
      %p251 = pneg %p180
      %p252 = pneg %p177
      %s253 = smul.u32 2, %s18
      %p254 = scmp.lt.s32.totalorder %s253, 3
      %s255 = scalar_select %p254, %s253, 3
      %s256 = smul.addr %s255, 8
      %s257 = scalar_lea.vmem %s6, %s256
      %s258 = smul.u32 2, %s18
      %p259 = scmp.lt.s32.totalorder %s258, 3
      %s260 = scalar_select %p259, %s258, 3
      %s261 = smul.addr %s260, 8
      %s262 = scalar_lea.vmem %s0, %s261
      %s263 = smul.u32 2, %s18
      %s264 = smul.u32 2, %s18
      %p265 = scmp.lt.s32.totalorder %s264, 3
      %s266 = scalar_select %p265, %s264, 3
      %s267 = smul.addr %s266, 4
      %s268 = scalar_lea.vmem %s4, %s267
      %s269 = smul.u32 2, %s18
      %s270 = smul.u32 2, %s18
      %p271 = scmp.lt.s32.totalorder %s270, 3
      %s272 = scalar_select %p271, %s270, 3
      %s273 = smul.addr %s272, 8
      %s274 = scalar_lea.vmem %s5, %s273
      %s275 = smul.u32 2, %s18
      %s276 = smul.u32 2, %s18
      %p277 = scmp.lt.s32.totalorder %s276, 3
      %s278 = scalar_select %p277, %s276, 3
      %s279 = smul.addr %s278, 8
      %s280 = scalar_lea.vmem %s6, %s279
      %s281 = smul.u32 2, %s18
      %v283 = vld [vmem:[%s262] sm:$0xff]
      %v284 = vld [vmem:[%s262 + $0x8] sm:$0xff]
      %v285 = vpack.c.bf16 %v284, %v283
      %v286 = vld [vmem:[%s1] sm:$0xf]
      %v287 = vld [vmem:[%s1 + $0x4] sm:$0xf]
      %v290 = vunpack.c.l.b16 %v286
      %v291 = vunpack.c.l.b16 %v287
      %v292 = vpack.c.b16 %v291, %v290
      %vm294 = vcmask 130048
      %v296 = vsel %vm294, %v285, 0
      %298 = vmatprep.subr.bf16.mxu0 0
      %299 = vmatpush1.bf16.msra.mxu0 0
      %300 = vmatprep.subr.bf16.mxu0 0
      %301 = vmatpush1.bf16.msra.mxu0 0
      %302 = vmatprep.subr.bf16.mxu0 0
      %303 = vmatpush1.bf16.msra.mxu0 0
      %304 = vmatprep.subr.bf16.mxu0 0
      %305 = vmatpush1.bf16.msra.mxu0 0
      %306 = vmatprep.subr.bf16.mxu0 0
      %307 = vmatpush1.bf16.msra.mxu0 0
      %308 = vmatprep.subr.bf16.mxu0 0
      %309 = vmatpush1.bf16.msra.mxu0 0
      %310 = vmatprep.subr.bf16.mxu0 0
      %311 = vmatpush1.bf16.msra.mxu0 0
      %312 = vmatprep.subr.bf16.mxu0 0
      %313 = vmatpush1.bf16.msra.mxu0 %v292
      %314 = vmatprep.subr.bf16.mxu0 0
      %315 = vmatpush2.bf16.msra.mxu0 0
      %316 = vmatprep.subr.bf16.mxu0 0
      %317 = vmatpush2.bf16.msra.mxu0 0
      %318 = vmatprep.subr.bf16.mxu0 0
      %319 = vmatpush2.bf16.msra.mxu0 0
      %320 = vmatprep.subr.bf16.mxu0 0
      %321 = vmatpush2.bf16.msra.mxu0 0
      %322 = vmatprep.subr.bf16.mxu0 0
      %323 = vmatpush2.bf16.msra.mxu0 0
      %324 = vmatprep.subr.bf16.mxu0 0
      %325 = vmatpush2.bf16.msra.mxu0 0
      %326 = vmatprep.subr.bf16.mxu0 0
      %327 = vmatpush2.bf16.msra.mxu0 0
      %328 = vmatprep.subr.bf16.mxu0 0
      %329 = vmatpush2.bf16.msra.mxu0 0
      %330 = vmatprep.mubr.bf16.mxu0 0
      %331 = vmatmul.mubr.bf16.gmra.mxu0 %v296
      %v332 = vpop.f32.mrf.mxu0
      %v333 = vadd.f32 0.0, %v332
      %v334 = vpop.f32.mrf.mxu0
      %v335 = vpop.f32.mrf.mxu0
      %v336 = vadd.f32 0.0, %v335
      %v337 = vpop.f32.mrf.mxu0
      %338 = vdwg.mxu0
      %v339 = vld [vmem:[%s2] sm:$0xff]
      %v340 = vld [vmem:[%s2 + $0x8] sm:$0xff]
      %v342 = vsel %vm294, %v333, 0
      %v345 = vsel %vm294, %v336, 0
      %347 = vmatprep.subr.mxu0 0.0
      %348 = vmatpush1.msra.mxu0 0.0
      %349 = vmatprep.subr.mxu0 0.0
      %350 = vmatpush1.msra.mxu0 0.0
      %351 = vmatprep.subr.mxu0 0.0
      %352 = vmatpush1.msra.mxu0 0.0
      %353 = vmatprep.subr.mxu0 0.0
      %354 = vmatpush1.msra.mxu0 0.0
      %355 = vmatprep.subr.mxu0 0.0
      %356 = vmatpush1.msra.mxu0 0.0
      %357 = vmatprep.subr.mxu0 0.0
      %358 = vmatpush1.msra.mxu0 0.0
      %359 = vmatprep.subr.mxu0 0.0
      %360 = vmatpush1.msra.mxu0 0.0
      %361 = vmatprep.subr.mxu0 0.0
      %362 = vmatpush1.msra.mxu0 0.0
      %363 = vmatprep.subr.mxu0 0.0
      %364 = vmatpush1.msra.mxu0 0.0
      %365 = vmatprep.subr.mxu0 0.0
      %366 = vmatpush1.msra.mxu0 0.0
      %367 = vmatprep.subr.mxu0 0.0
      %368 = vmatpush1.msra.mxu0 0.0
      %369 = vmatprep.subr.mxu0 0.0
      %370 = vmatpush1.msra.mxu0 0.0
      %371 = vmatprep.subr.mxu0 0.0
      %372 = vmatpush1.msra.mxu0 0.0
      %373 = vmatprep.subr.mxu0 0.0
      %374 = vmatpush1.msra.mxu0 0.0
      %375 = vmatprep.subr.mxu0 0.0
      %376 = vmatpush1.msra.mxu0 %v340
      %377 = vmatprep.subr.mxu0 0.0
      %378 = vmatpush1.msra.mxu0 %v339
      %379 = vmatprep.subr.mxu0 0.0
      %380 = vmatpush2.msra.mxu0 0.0
      %381 = vmatprep.subr.mxu0 0.0
      %382 = vmatpush2.msra.mxu0 0.0
      %383 = vmatprep.subr.mxu0 0.0
      %384 = vmatpush2.msra.mxu0 0.0
      %385 = vmatprep.subr.mxu0 0.0
      %386 = vmatpush2.msra.mxu0 0.0
      %387 = vmatprep.subr.mxu0 0.0
      %388 = vmatpush2.msra.mxu0 0.0
      %389 = vmatprep.subr.mxu0 0.0
      %390 = vmatpush2.msra.mxu0 0.0
      %391 = vmatprep.subr.mxu0 0.0
      %392 = vmatpush2.msra.mxu0 0.0
      %393 = vmatprep.subr.mxu0 0.0
      %394 = vmatpush2.msra.mxu0 0.0
      %395 = vmatprep.subr.mxu0 0.0
      %396 = vmatpush2.msra.mxu0 0.0
      %397 = vmatprep.subr.mxu0 0.0
      %398 = vmatpush2.msra.mxu0 0.0
      %399 = vmatprep.subr.mxu0 0.0
      %400 = vmatpush2.msra.mxu0 0.0
      %401 = vmatprep.subr.mxu0 0.0
      %402 = vmatpush2.msra.mxu0 0.0
      %403 = vmatprep.subr.mxu0 0.0
      %404 = vmatpush2.msra.mxu0 0.0
      %405 = vmatprep.subr.mxu0 0.0
      %406 = vmatpush2.msra.mxu0 0.0
      %407 = vmatprep.subr.mxu0 0.0
      %408 = vmatpush2.msra.mxu0 0.0
      %409 = vmatprep.subr.mxu0 0.0
      %410 = vmatpush2.msra.mxu0 0.0
      %411 = vmatprep.mubr.f32.mxu0 0.0
      %412 = vmatmul.mubr.f32.gmra.mxu0 %v342
      %v413 = vpop.f32.mrf.mxu0
      %v414 = vadd.f32 0.0, %v413
      %v415 = vpop.f32.mrf.mxu0
      %416 = vmatprep.mubr.f32.mxu0 0.0
      %417 = vmatmul.mubr.f32.gmra.mxu0 %v345
      %v418 = vpop.f32.mrf.mxu0
      %v419 = vadd.f32 0.0, %v418
      %v420 = vpop.f32.mrf.mxu0
      %421 = vdwg.mxu0
      %vm422 = vcmask 15360
      %423 = vst.msk [vmem:[%s274] sm:$0xff] %vm422, %v414
      %424 = vst.msk [vmem:[%s274 + $0x8] sm:$0xff] %vm422, %v419
      %v425 = vld [vmem:[%s3] sm:$0xff]
      %v426 = vld [vmem:[%s3 + $0x8] sm:$0xff]
      %427 = vmatprep.subr.mxu0 0.0
      %428 = vmatpush1.msra.mxu0 0.0
      %429 = vmatprep.subr.mxu0 0.0
      %430 = vmatpush1.msra.mxu0 0.0
      %431 = vmatprep.subr.mxu0 0.0
      %432 = vmatpush1.msra.mxu0 0.0
      %433 = vmatprep.subr.mxu0 0.0
      %434 = vmatpush1.msra.mxu0 0.0
      %435 = vmatprep.subr.mxu0 0.0
      %436 = vmatpush1.msra.mxu0 0.0
      %437 = vmatprep.subr.mxu0 0.0
      %438 = vmatpush1.msra.mxu0 0.0
      %439 = vmatprep.subr.mxu0 0.0
      %440 = vmatpush1.msra.mxu0 0.0
      %441 = vmatprep.subr.mxu0 0.0
      %442 = vmatpush1.msra.mxu0 0.0
      %443 = vmatprep.subr.mxu0 0.0
      %444 = vmatpush1.msra.mxu0 0.0
      %445 = vmatprep.subr.mxu0 0.0
      %446 = vmatpush1.msra.mxu0 0.0
      %447 = vmatprep.subr.mxu0 0.0
      %448 = vmatpush1.msra.mxu0 0.0
      %449 = vmatprep.subr.mxu0 0.0
      %450 = vmatpush1.msra.mxu0 0.0
      %451 = vmatprep.subr.mxu0 0.0
      %452 = vmatpush1.msra.mxu0 0.0
      %453 = vmatprep.subr.mxu0 0.0
      %454 = vmatpush1.msra.mxu0 0.0
      %455 = vmatprep.subr.mxu0 0.0
      %456 = vmatpush1.msra.mxu0 %v426
      %457 = vmatprep.subr.mxu0 0.0
      %458 = vmatpush1.msra.mxu0 %v425
      %459 = vmatprep.subr.mxu0 0.0
      %460 = vmatpush2.msra.mxu0 0.0
      %461 = vmatprep.subr.mxu0 0.0
      %462 = vmatpush2.msra.mxu0 0.0
      %463 = vmatprep.subr.mxu0 0.0
      %464 = vmatpush2.msra.mxu0 0.0
      %465 = vmatprep.subr.mxu0 0.0
      %466 = vmatpush2.msra.mxu0 0.0
      %467 = vmatprep.subr.mxu0 0.0
      %468 = vmatpush2.msra.mxu0 0.0
      %469 = vmatprep.subr.mxu0 0.0
      %470 = vmatpush2.msra.mxu0 0.0
      %471 = vmatprep.subr.mxu0 0.0
      %472 = vmatpush2.msra.mxu0 0.0
      %473 = vmatprep.subr.mxu0 0.0
      %474 = vmatpush2.msra.mxu0 0.0
      %475 = vmatprep.subr.mxu0 0.0
      %476 = vmatpush2.msra.mxu0 0.0
      %477 = vmatprep.subr.mxu0 0.0
      %478 = vmatpush2.msra.mxu0 0.0
      %479 = vmatprep.subr.mxu0 0.0
      %480 = vmatpush2.msra.mxu0 0.0
      %481 = vmatprep.subr.mxu0 0.0
      %482 = vmatpush2.msra.mxu0 0.0
      %483 = vmatprep.subr.mxu0 0.0
      %484 = vmatpush2.msra.mxu0 0.0
      %485 = vmatprep.subr.mxu0 0.0
      %486 = vmatpush2.msra.mxu0 0.0
      %487 = vmatprep.subr.mxu0 0.0
      %488 = vmatpush2.msra.mxu0 0.0
      %489 = vmatprep.subr.mxu0 0.0
      %490 = vmatpush2.msra.mxu0 0.0
      %491 = vmatprep.mubr.f32.mxu0 0.0
      %492 = vmatmul.mubr.f32.gmra.mxu0 %v342
      %v493 = vpop.f32.mrf.mxu0
      %v494 = vadd.f32 0.0, %v493
      %v495 = vpop.f32.mrf.mxu0
      %496 = vmatprep.mubr.f32.mxu0 0.0
      %497 = vmatmul.mubr.f32.gmra.mxu0 %v345
      %v498 = vpop.f32.mrf.mxu0
      %v499 = vadd.f32 0.0, %v498
      %v500 = vpop.f32.mrf.mxu0
      %501 = vdwg.mxu0
      %502 = vst.msk [vmem:[%s280] sm:$0xff] %vm422, %v494
      %503 = vst.msk [vmem:[%s280 + $0x8] sm:$0xff] %vm422, %v499
      %v504 = vpack.c.bf16 %v336, %v333
      %v506 = vunpack.c.l.b16 %v504
      %v507 = vunpack.c.h.b16 %v504
      %v508 = vpack.c.b16 %v506, %v506
      %v509 = vpack.c.b16 %v507, %v507
      %vm512 = vcmask 125952
      %513 = vst.msk [vmem:[%s268] sm:$0xf] %vm512, %v508
      %514 = vst.msk [vmem:[%s268 + $0x4] sm:$0xf] %vm512, %v509
      %s515 = smul.u32 2, %s18
      %p516 = scmp.lt.s32.totalorder %s515, 3
      %s517 = scalar_select %p516, %s515, 3
      %s518 = smul.addr %s517, 4
      %s519 = scalar_lea.vmem %s4, %s518
      %s520 = smul.u32 2, %s18
      %p521 = scmp.lt.s32.totalorder %s520, 3
      %s522 = scalar_select %p521, %s520, 3
      %s523 = smul.addr %s522, 8
      %s524 = scalar_lea.vmem %s5, %s523
      %s525 = smul.u32 2, %s18
      %p526 = scmp.lt.s32.totalorder %s525, 3
      %s527 = scalar_select %p526, %s525, 3
      %s528 = smul.addr %s527, 8
      %s529 = scalar_lea.vmem %s6, %s528
      // Predicated region
      $region37: #{gatnet_forward.4} parent=35 // pred_check
        %p530 = pneg %p125
      $region38: #{gatnet_forward.4} parent=35 // pred_check_branch
        %532 = sbr.rel (%p530) target = $region40
      $region39: #{gatnet_forward.4} parent=35 // pred_region
        %s533 = smul.u32 2, %s18
      $region40: #{gatnet_forward.4} parent=35 // pred_fallthru
        _
      // Predicated region
      $region41: #{gatnet_forward.4} parent=35 // pred_check
        %p534 = pneg %p151
      $region42: #{gatnet_forward.4} parent=35 // pred_check_branch
        %536 = sbr.rel (%p534) target = $region44
      $region43: #{gatnet_forward.4} parent=35 // pred_region
        %s537 = smul.u32 2, %s18
      $region44: #{gatnet_forward.4} parent=35 // pred_fallthru
        _
      // Predicated region
      $region45: #{gatnet_forward.4} parent=35 // pred_check
        %p538 = pneg %p177
      $region46: #{gatnet_forward.4} parent=35 // pred_check_branch
        %540 = sbr.rel (%p538) target = $region48
      $region47: #{gatnet_forward.4} parent=35 // pred_region
        %s541 = smul.u32 2, %s18
      $region48: #{gatnet_forward.4} parent=35 // pred_fallthru
        _
    $region36: #{gatnet_forward.4} parent=5 // pred_fallthru
      _
    %p542 = scmp.le.s32.totalorder 2, %s13
    // Predicated region
    $region49: #{gatnet_forward.4} parent=5 // pred_check
      %p543 = pneg %p542
    $region50: #{gatnet_forward.4} parent=5 // pred_check_branch
      %545 = sbr.rel (%p543) target = $region52
    $region51: #{gatnet_forward.4} parent=5 // pred_region
      %s546 = ssub.s32 %s13, 2
      // Predicated region
      $region53: #{gatnet_forward.4} parent=51 // pred_check
        %p547 = pneg %p131
      $region54: #{gatnet_forward.4} parent=51 // pred_check_branch
        %549 = sbr.rel (%p547) target = $region56
      $region55: #{gatnet_forward.4} parent=51 // pred_region
        %s550 = smul.u32 2, %s19
        %p551 = scmp.lt.s32.totalorder %s550, 3
        %s552 = scalar_select %p551, %s550, 3
        %s553 = smul.addr %s552, 4
        %s554 = scalar_lea.vmem %s4, %s553
      $region56: #{gatnet_forward.4} parent=51 // pred_fallthru
        _
      // Predicated region
      $region57: #{gatnet_forward.4} parent=51 // pred_check
        %p555 = pneg %p157
      $region58: #{gatnet_forward.4} parent=51 // pred_check_branch
        %557 = sbr.rel (%p555) target = $region60
      $region59: #{gatnet_forward.4} parent=51 // pred_region
        %s558 = smul.u32 2, %s19
        %p559 = scmp.lt.s32.totalorder %s558, 3
        %s560 = scalar_select %p559, %s558, 3
        %s561 = smul.addr %s560, 8
        %s562 = scalar_lea.vmem %s5, %s561
      $region60: #{gatnet_forward.4} parent=51 // pred_fallthru
        _
      // Predicated region
      $region61: #{gatnet_forward.4} parent=51 // pred_check
        %p563 = pneg %p183
      $region62: #{gatnet_forward.4} parent=51 // pred_check_branch
        %565 = sbr.rel (%p563) target = $region64
      $region63: #{gatnet_forward.4} parent=51 // pred_region
        %s566 = smul.u32 2, %s19
        %p567 = scmp.lt.s32.totalorder %s566, 3
        %s568 = scalar_select %p567, %s566, 3
        %s569 = smul.addr %s568, 8
        %s570 = scalar_lea.vmem %s6, %s569
      $region64: #{gatnet_forward.4} parent=51 // pred_fallthru
        _
    $region52: #{gatnet_forward.4} parent=5 // pred_fallthru
      _
  $region6: #{gatnet_forward.4} parent=0 // loop_footer
    %s17 = sadd.s32 1, %s13
  $region7: #{gatnet_forward.4} parent=0 // loop_footer_branch
    %12 = sbr.rel target = $region3
  $region8: #{gatnet_forward.4} parent=0 // loop_exit
    _

</llo_original>
